<compile_context>
chip_gen: v6e
topology: v6e:2x2x1
jax: 0.10.0
libtpu: 0.0.40
codegen_flags: <defaults>
</compile_context>

<pallas_src>
import functools

import jax
import jax.numpy as jnp
from jax import lax
from jax.experimental import pallas as pl
from jax.experimental.pallas import tpu as pltpu

LN_EPS = 1e-5  # torch.nn.LayerNorm default


# ---------------------------------------------------------------------------
# In-kernel helpers
# ---------------------------------------------------------------------------
def _layernorm(x, g, b):
    mu = jnp.mean(x, axis=-1, keepdims=True)
    var = jnp.mean(jnp.square(x - mu), axis=-1, keepdims=True)
    return (x - mu) * lax.rsqrt(var + LN_EPS) * g + b


# ---------------------------------------------------------------------------
# Fused per-layer kernel (grid = (batch, layer); residual stream in VMEM)
# ---------------------------------------------------------------------------
def transformer_layer_kernel(
        scales_ref,                 # (1, 1, 4) f32: [a_qkv, a_out, a_w1, a_w2]
        x_ref,                      # (1, N, D)  input activations (read at layer 0)
        ag_ref, ab_ref,             # (1, 1, D)  attention pre-LN gamma/beta
        wqkv_ref,                   # (1, 3*inner, D)  bf16 sign matrix (torch layout)
        wout_ref,                   # (1, inner, D)    bf16 sign matrix
        bout_ref,                   # (1, 1, D)
        fg_ref, fb_ref,             # (1, 1, D)  FFN pre-LN gamma/beta
        w1_ref,                     # (1, D, H)  bf16 sign matrix
        b1_ref,                     # (1, 1, H)
        w2_ref,                     # (1, H, D)  bf16 sign matrix
        b2_ref,                     # (1, 1, D)
        ng_ref, nb_ref,             # (1, D)     final LayerNorm gamma/beta
        o_ref,                      # (1, N, D)  output (written at the last layer)
        x_sc,                       # VMEM (N, D) f32 scratch: residual stream
        *, heads, dim_head, matmul_dtype):
    layer = pl.program_id(1)
    md = matmul_dtype
    inner = heads * dim_head
    N, D = x_sc.shape
    scale = dim_head ** -0.5

    # Pull the residual stream into VMEM scratch once per batch element.
    @pl.when(layer == 0)
    def _():
        x_sc[...] = x_ref[0].astype(jnp.float32)

    x = x_sc[...]                                   # (N, D) f32

    sc = scales_ref[0]                              # (1, 4) f32
    a_qkv, a_out = sc[:, 0:1], sc[:, 1:2]
    a_w1, a_w2 = sc[:, 2:3], sc[:, 3:4]

    # ---------------- attention sub-block:  x = Attn(LN(x)) + x ----------------
    xn = _layernorm(x, ag_ref[0], ab_ref[0])        # (N, D) f32
    xnT = xn.T.astype(md)                           # (D, N)

    # One projection matmul with K = D; output rows carry the (qkv, head) split
    # on sublanes, so the head split below is a sublane slice + free reshape.
    qkvT = jnp.dot(wqkv_ref[0], xnT,
                   preferred_element_type=jnp.float32) * a_qkv   # (3*inner, N) f32

    qT = qkvT[0 * inner:1 * inner].reshape(heads, dim_head, N)
    kT = qkvT[1 * inner:2 * inner].reshape(heads, dim_head, N)
    vT = qkvT[2 * inner:3 * inner].reshape(heads, dim_head, N)
    q = jnp.swapaxes(qT, 1, 2).astype(md)           # (heads, N, dim_head)
    k = jnp.swapaxes(kT, 1, 2).astype(md)
    v = jnp.swapaxes(vT, 1, 2).astype(md)

    dots = jnp.einsum('hqd,hkd->hqk', q, k,
                      preferred_element_type=jnp.float32) * scale   # (h, N, N) f32
    dots = dots - jnp.max(dots, axis=-1, keepdims=True)
    e = jnp.exp(dots)
    p = e * pl.reciprocal(jnp.sum(e, axis=-1, keepdims=True), approx=True)
    o_h = jnp.einsum('hqk,hkd->hqd', p.astype(md), v,
                     preferred_element_type=jnp.float32)            # (h, N, dh) f32

    # Merge heads back onto lanes and do ONE (N, inner) @ (inner, D) projection.
    o_flat = jnp.swapaxes(o_h, 1, 2).reshape(inner, N).T.astype(md)  # (N, inner)
    y = jnp.dot(o_flat, wout_ref[0],
                preferred_element_type=jnp.float32) * a_out + bout_ref[0]
    x = x + y

    # ---------------- feed-forward sub-block:  x = FFN(LN(x)) + x --------------
    xn2 = _layernorm(x, fg_ref[0], fb_ref[0]).astype(md)             # (N, D)
    hid = jnp.dot(xn2, w1_ref[0],
                  preferred_element_type=jnp.float32) * a_w1 + b1_ref[0]
    # TODO(synk): torch.nn.GELU() defaults to the exact erf GELU; tanh approx used.
    hid = jax.nn.gelu(hid, approximate=True)
    y2 = jnp.dot(hid.astype(md), w2_ref[0],
                 preferred_element_type=jnp.float32) * a_w2 + b2_ref[0]
    x = x + y2

    x_sc[...] = x

    # Fused final LayerNorm + single lane-dense store at the last layer.
    @pl.when(layer == pl.num_programs(1) - 1)
    def _():
        o_ref[0] = _layernorm(x, ng_ref[...], nb_ref[...]).astype(o_ref.dtype)


# ---------------------------------------------------------------------------
# pallas_call wrapper
# ---------------------------------------------------------------------------
def _layer_spec(shape):
    """Per-layer stacked parameter: block (1, ...) indexed by the layer grid axis."""
    n_rest = len(shape) - 1
    return pl.BlockSpec((1,) + tuple(shape[1:]),
                        lambda b, l, _n=n_rest: (l,) + (0,) * _n)


def sparse_ternary_transformer(x, packed, *, heads, dim_head,
                               matmul_dtype=jnp.bfloat16):
    """Whole-network fused forward: one pallas_call over grid (batch, layer)."""
    B, N, D = x.shape
    depth = packed["wqkv"].shape[0]
    inner = heads * dim_head
    assert packed["wqkv"].shape[1] == 3 * inner

    kern = functools.partial(transformer_layer_kernel, heads=heads,
                             dim_head=dim_head, matmul_dtype=matmul_dtype)

    # NOTE: for real ViT sizes (D >= 768) the (1, N, D) activation blocks are
    # lane-dense; the toy D=32 demo underfills lanes but stays correct.
    batch_spec = pl.BlockSpec((1, N, D), lambda b, l: (b, 0, 0))
    norm_spec = pl.BlockSpec((1, D), lambda b, l: (0, 0))

    in_specs = [
        _layer_spec(packed["scales"].shape),
        batch_spec,                                  # x: resident across the layer axis
        _layer_spec(packed["attn_g"].shape),
        _layer_spec(packed["attn_b"].shape),
        _layer_spec(packed["wqkv"].shape),
        _layer_spec(packed["wout"].shape),
        _layer_spec(packed["bout"].shape),
        _layer_spec(packed["ff_g"].shape),
        _layer_spec(packed["ff_b"].shape),
        _layer_spec(packed["w1"].shape),
        _layer_spec(packed["b1"].shape),
        _layer_spec(packed["w2"].shape),
        _layer_spec(packed["b2"].shape),
        norm_spec, norm_spec,
    ]

    return pl.pallas_call(
        kern,
        out_shape=jax.ShapeDtypeStruct((B, N, D), x.dtype),
        grid=(B, depth),
        in_specs=in_specs,
        out_specs=batch_spec,
        scratch_shapes=[pltpu.VMEM((N, D), jnp.float32)],
        compiler_params=pltpu.CompilerParams(
            dimension_semantics=("parallel", "arbitrary")),
    )(packed["scales"], x,
      packed["attn_g"], packed["attn_b"], packed["wqkv"], packed["wout"],
      packed["bout"], packed["ff_g"], packed["ff_b"], packed["w1"],
      packed["b1"], packed["w2"], packed["b2"],
      packed["norm_g"], packed["norm_b"])


# ---------------------------------------------------------------------------
# Host-side: ternary-sparse quantization (done ONCE, cached) + param packing
# ---------------------------------------------------------------------------
def ternary_quantize(w, sparsity):
    """Return (sign, alpha) with quantized weight == alpha * sign, sign in {-1,0,+1}.

    The `sparsity` fraction of smallest-|w| entries is zeroed; alpha is the mean
    |w| of the surviving weights."""
    absw = jnp.abs(w)
    if sparsity <= 0.0:
        mask = jnp.ones(w.shape, dtype=bool)
    else:
        thr = jnp.quantile(absw.reshape(-1), sparsity)
        mask = absw > thr
    kept = jnp.maximum(jnp.sum(mask.astype(jnp.float32)), 1.0)
    alpha = jnp.sum(jnp.where(mask, absw, 0.0)) / kept
    sign = jnp.where(mask, jnp.sign(w), 0.0)
    return sign, alpha


def init_params(key, dim, depth, heads, dim_head, mlp_dim):
    inner = heads * dim_head

    def lin(k, fan_in, fan_out):
        return jax.random.normal(k, (fan_in, fan_out), jnp.float32) * 0.02

    layers = []
    for _ in range(depth):
        key, k1, k2, k3, k4 = jax.random.split(key, 5)
        attn = dict(
            ln_g=jnp.ones((1, dim), jnp.float32),
            ln_b=jnp.zeros((1, dim), jnp.float32),
            w_qkv=lin(k1, dim, 3 * inner),            # to_qkv (bias=False)
            w_out=lin(k2, inner, dim),                # to_out
            b_out=jnp.zeros((1, dim), jnp.float32),
        )
        ff = dict(
            ln_g=jnp.ones((1, dim), jnp.float32),
            ln_b=jnp.zeros((1, dim), jnp.float32),
            w1=lin(k3, dim, mlp_dim),
            b1=jnp.zeros((1, mlp_dim), jnp.float32),
            w2=lin(k4, mlp_dim, dim),
            b2=jnp.zeros((1, dim), jnp.float32),
        )
        layers.append(dict(attn=attn, ff=ff))

    return dict(layers=layers,
                norm_g=jnp.ones((1, dim), jnp.float32),
                norm_b=jnp.zeros((1, dim), jnp.float32))


def pack_params(params, sparsity, matmul_dtype=jnp.bfloat16):
    """Quantize + restack the weights once (cached across forward calls).

    Ternary weights become {-1,0,+1} sign matrices in `matmul_dtype` (exact in
    bf16) plus one f32 scale per matrix, folded into the kernel epilogue."""
    layers = params["layers"]
    depth = len(layers)
    wqkv, wout, w1, w2, scales = [], [], [], [], []
    attn_g, attn_b, bout = [], [], []
    ff_g, ff_b, b1, b2 = [], [], [], []
    one = jnp.float32(1.0)
    for i, layer in enumerate(layers):
        ap, fp = layer["attn"], layer["ff"]
        s_qkv, a_qkv = ternary_quantize(ap["w_qkv"], sparsity)
        s_out, a_out = ternary_quantize(ap["w_out"], sparsity)
        if i == depth - 1:
            # Last layer uses a plain (unquantized) ViTFeedForward.
            # TODO(synk): its raw weights are still stored in matmul_dtype (bf16).
            s1, a1 = fp["w1"], one
            s2, a2 = fp["w2"], one
        else:
            s1, a1 = ternary_quantize(fp["w1"], sparsity)
            s2, a2 = ternary_quantize(fp["w2"], sparsity)
        wqkv.append(s_qkv.T.astype(matmul_dtype))    # (3*inner, D) torch layout
        wout.append(s_out.astype(matmul_dtype))      # (inner, D)
        w1.append(s1.astype(matmul_dtype))           # (D, H)
        w2.append(s2.astype(matmul_dtype))           # (H, D)
        scales.append(jnp.stack([a_qkv, a_out, a1, a2]).astype(jnp.float32))
        attn_g.append(ap["ln_g"]); attn_b.append(ap["ln_b"]); bout.append(ap["b_out"])
        ff_g.append(fp["ln_g"]); ff_b.append(fp["ln_b"])
        b1.append(fp["b1"]); b2.append(fp["b2"])

    return dict(
        scales=jnp.stack(scales)[:, None, :],        # (depth, 1, 4) f32
        wqkv=jnp.stack(wqkv), wout=jnp.stack(wout),
        w1=jnp.stack(w1), w2=jnp.stack(w2),
        attn_g=jnp.stack(attn_g), attn_b=jnp.stack(attn_b), bout=jnp.stack(bout),
        ff_g=jnp.stack(ff_g), ff_b=jnp.stack(ff_b),
        b1=jnp.stack(b1), b2=jnp.stack(b2),
        norm_g=params["norm_g"], norm_b=params["norm_b"],
    )


# ---------------------------------------------------------------------------
if __name__ == "__main__":
    dim, depth, heads, dim_head, mlp_dim = 32, 2, 4, 8, 64
    B, N = 2, 8
    sparsity = 0.5

    key = jax.random.PRNGKey(0)
    key, kx = jax.random.split(key)
    x = jax.random.normal(kx, (B, N, dim), jnp.float32)
    params = init_params(key, dim, depth, heads, dim_head, mlp_dim)

    # Quantization / packing happens once, outside the forward (cached).
    packed = pack_params(params, sparsity)

    fwd = jax.jit(functools.partial(sparse_ternary_transformer,
                                    heads=heads, dim_head=dim_head))
    out = fwd(x, packed)
    out = jax.block_until_ready(out)

    assert out.shape == (B, N, dim) and out.dtype == jnp.float32
    assert bool(jnp.all(jnp.isfinite(out)))
    print("KERNEL_OK")
</pallas_src>

<mosaic_0001>
module attributes {stable_mosaic.version = 11 : i64} {
  func.func @transformer_layer_kernel(%arg0: i32, %arg1: i32, %arg2: memref<1x1x4xf32, #tpu.memory_space<vmem>>, %arg3: memref<1x8x32xf32, #tpu.memory_space<vmem>>, %arg4: memref<1x1x32xf32, #tpu.memory_space<vmem>>, %arg5: memref<1x1x32xf32, #tpu.memory_space<vmem>>, %arg6: memref<1x96x32xbf16, #tpu.memory_space<vmem>>, %arg7: memref<1x32x32xbf16, #tpu.memory_space<vmem>>, %arg8: memref<1x1x32xf32, #tpu.memory_space<vmem>>, %arg9: memref<1x1x32xf32, #tpu.memory_space<vmem>>, %arg10: memref<1x1x32xf32, #tpu.memory_space<vmem>>, %arg11: memref<1x32x64xbf16, #tpu.memory_space<vmem>>, %arg12: memref<1x1x64xf32, #tpu.memory_space<vmem>>, %arg13: memref<1x64x32xbf16, #tpu.memory_space<vmem>>, %arg14: memref<1x1x32xf32, #tpu.memory_space<vmem>>, %arg15: memref<1x32xf32, #tpu.memory_space<vmem>>, %arg16: memref<1x32xf32, #tpu.memory_space<vmem>>, %arg17: memref<1x8x32xf32, #tpu.memory_space<vmem>>, %arg18: memref<8x32xf32, #tpu.memory_space<vmem>>) attributes {dimension_semantics = [#tpu.dimension_semantics<parallel>, #tpu.dimension_semantics<arbitrary>], iteration_bounds = array<i64: 2, 2>, scalar_prefetch = 0 : i64, scratch_operands = 1 : i64, tpu.core_type = #tpu.core_type<tc>, window_params = [{transform_indices = @transform_0, window_bounds = array<i64: 1, 1, 4>}, {transform_indices = @transform_1, window_bounds = array<i64: 1, 8, 32>}, {transform_indices = @transform_2, window_bounds = array<i64: 1, 1, 32>}, {transform_indices = @transform_3, window_bounds = array<i64: 1, 1, 32>}, {transform_indices = @transform_4, window_bounds = array<i64: 1, 96, 32>}, {transform_indices = @transform_5, window_bounds = array<i64: 1, 32, 32>}, {transform_indices = @transform_6, window_bounds = array<i64: 1, 1, 32>}, {transform_indices = @transform_7, window_bounds = array<i64: 1, 1, 32>}, {transform_indices = @transform_8, window_bounds = array<i64: 1, 1, 32>}, {transform_indices = @transform_9, window_bounds = array<i64: 1, 32, 64>}, {transform_indices = @transform_10, window_bounds = array<i64: 1, 1, 64>}, {transform_indices = @transform_11, window_bounds = array<i64: 1, 64, 32>}, {transform_indices = @transform_12, window_bounds = array<i64: 1, 1, 32>}, {pipeline_mode = #tpu.pipeline_mode<synchronous>, transform_indices = @transform_13, window_bounds = array<i64: 1, 32>}, {pipeline_mode = #tpu.pipeline_mode<synchronous>, transform_indices = @transform_14, window_bounds = array<i64: 1, 32>}, {transform_indices = @transform_15, window_bounds = array<i64: 1, 8, 32>}]} {
    %c0_i32 = arith.constant 0 : i32
    %0 = arith.cmpi eq, %arg1, %c0_i32 : i32
    %1 = arith.extui %0 : i1 to i32
    %c0_i32_0 = arith.constant 0 : i32
    %2 = arith.cmpi ne, %1, %c0_i32_0 : i32
    scf.if %2 {
      %c0_63 = arith.constant 0 : index
      %c0_64 = arith.constant 0 : index
      %c0_65 = arith.constant 0 : index
      %148 = vector.load %arg3[%c0_63, %c0_64, %c0_65] : memref<1x8x32xf32, #tpu.memory_space<vmem>>, vector<1x8x32xf32>
      %149 = vector.shape_cast %148 : vector<1x8x32xf32> to vector<8x32xf32>
      %c0_66 = arith.constant 0 : index
      %c0_67 = arith.constant 0 : index
      %150 = vector.load %arg18[%c0_66, %c0_67] : memref<8x32xf32, #tpu.memory_space<vmem>>, vector<8x32xf32>
      tpu.vector_store %arg18[%c0_66, %c0_67], %149 {strides = array<i32>} : memref<8x32xf32, #tpu.memory_space<vmem>>, vector<8x32xf32>,
    } else {
    }
    %c0 = arith.constant 0 : index
    %c0_1 = arith.constant 0 : index
    %3 = vector.load %arg18[%c0, %c0_1] : memref<8x32xf32, #tpu.memory_space<vmem>>, vector<8x32xf32>
    %c0_2 = arith.constant 0 : index
    %c0_3 = arith.constant 0 : index
    %c0_4 = arith.constant 0 : index
    %4 = vector.load %arg2[%c0_2, %c0_3, %c0_4] : memref<1x1x4xf32, #tpu.memory_space<vmem>>, vector<1x1x4xf32>
    %5 = vector.shape_cast %4 : vector<1x1x4xf32> to vector<1x4xf32>
    %6 = vector.extract_strided_slice %5 {offsets = [0, 0], sizes = [1, 1], strides = [1, 1]} : vector<1x4xf32> to vector<1x1xf32>
    %7 = vector.extract_strided_slice %5 {offsets = [0, 1], sizes = [1, 1], strides = [1, 1]} : vector<1x4xf32> to vector<1x1xf32>
    %8 = vector.extract_strided_slice %5 {offsets = [0, 2], sizes = [1, 1], strides = [1, 1]} : vector<1x4xf32> to vector<1x1xf32>
    %9 = vector.extract_strided_slice %5 {offsets = [0, 3], sizes = [1, 1], strides = [1, 1]} : vector<1x4xf32> to vector<1x1xf32>
    %c0_5 = arith.constant 0 : index
    %c0_6 = arith.constant 0 : index
    %c0_7 = arith.constant 0 : index
    %10 = vector.load %arg4[%c0_5, %c0_6, %c0_7] : memref<1x1x32xf32, #tpu.memory_space<vmem>>, vector<1x1x32xf32>
    %11 = vector.shape_cast %10 : vector<1x1x32xf32> to vector<1x32xf32>
    %c0_8 = arith.constant 0 : index
    %c0_9 = arith.constant 0 : index
    %c0_10 = arith.constant 0 : index
    %12 = vector.load %arg5[%c0_8, %c0_9, %c0_10] : memref<1x1x32xf32, #tpu.memory_space<vmem>>, vector<1x1x32xf32>
    %13 = vector.shape_cast %12 : vector<1x1x32xf32> to vector<1x32xf32>
    %cst = arith.constant dense<0.000000e+00> : vector<8xf32>
    %14 = vector.multi_reduction <add>, %3, %cst [1] : vector<8x32xf32> to vector<8xf32>
    %15 = vector.shape_cast %14 : vector<8xf32> to vector<8x1xf32>
    %cst_11 = arith.constant 3.200000e+01 : f32
    %16 = vector.broadcast %cst_11 : f32 to vector<8x1xf32>
    %17 = arith.divf %15, %16 : vector<8x1xf32>
    %18 = vector.broadcast %17 : vector<8x1xf32> to vector<8x32xf32>
    %19 = arith.subf %3, %18 : vector<8x32xf32>
    %20 = arith.mulf %19, %19 : vector<8x32xf32>
    %cst_12 = arith.constant dense<0.000000e+00> : vector<8xf32>
    %21 = vector.multi_reduction <add>, %20, %cst_12 [1] : vector<8x32xf32> to vector<8xf32>
    %22 = vector.shape_cast %21 : vector<8xf32> to vector<8x1xf32>
    %cst_13 = arith.constant 3.200000e+01 : f32
    %23 = vector.broadcast %cst_13 : f32 to vector<8x1xf32>
    %24 = arith.divf %22, %23 : vector<8x1xf32>
    %25 = vector.broadcast %17 : vector<8x1xf32> to vector<8x32xf32>
    %26 = arith.subf %3, %25 : vector<8x32xf32>
    %cst_14 = arith.constant 9.99999974E-6 : f32
    %27 = vector.broadcast %cst_14 : f32 to vector<8x1xf32>
    %28 = arith.addf %24, %27 : vector<8x1xf32>
    %29 = math.rsqrt %28 : vector<8x1xf32>
    %30 = vector.broadcast %29 : vector<8x1xf32> to vector<8x32xf32>
    %31 = arith.mulf %26, %30 : vector<8x32xf32>
    %32 = vector.broadcast %11 : vector<1x32xf32> to vector<8x32xf32>
    %33 = arith.mulf %31, %32 : vector<8x32xf32>
    %34 = vector.broadcast %13 : vector<1x32xf32> to vector<8x32xf32>
    %35 = arith.addf %33, %34 : vector<8x32xf32>
    %36 = tpu.transpose %35, [1, 0] : vector<8x32xf32> -> vector<32x8xf32>
    %37 = arith.truncf %36 : vector<32x8xf32> to vector<32x8xbf16>
    %c0_15 = arith.constant 0 : index
    %c0_16 = arith.constant 0 : index
    %c0_17 = arith.constant 0 : index
    %38 = vector.load %arg6[%c0_15, %c0_16, %c0_17] : memref<1x96x32xbf16, #tpu.memory_space<vmem>>, vector<1x96x32xbf16>
    %39 = vector.shape_cast %38 : vector<1x96x32xbf16> to vector<96x32xbf16>
    %cst_18 = arith.constant dense<0.000000e+00> : vector<96x8xf32>
    %40 = tpu.matmul %39, %37, %cst_18 {dimension_numbers = #tpu.dot_dimension_numbers<[1], [0], [0], [1], [0, 0, 1, 1], [], []>} : vector<96x32xbf16>, vector<32x8xbf16>, vector<96x8xf32> -> vector<96x8xf32>
    %41 = vector.broadcast %6 : vector<1x1xf32> to vector<96x8xf32>
    %42 = arith.mulf %40, %41 : vector<96x8xf32>
    %43 = vector.extract_strided_slice %42 {offsets = [0, 0], sizes = [32, 8], strides = [1, 1]} : vector<96x8xf32> to vector<32x8xf32>
    %44 = vector.shape_cast %43 : vector<32x8xf32> to vector<4x8x8xf32>
    %45 = vector.extract_strided_slice %42 {offsets = [32, 0], sizes = [32, 8], strides = [1, 1]} : vector<96x8xf32> to vector<32x8xf32>
    %46 = vector.shape_cast %45 : vector<32x8xf32> to vector<4x8x8xf32>
    %47 = vector.extract_strided_slice %42 {offsets = [64, 0], sizes = [32, 8], strides = [1, 1]} : vector<96x8xf32> to vector<32x8xf32>
    %48 = vector.shape_cast %47 : vector<32x8xf32> to vector<4x8x8xf32>
    %49 = tpu.transpose %44, [0, 2, 1] : vector<4x8x8xf32> -> vector<4x8x8xf32>
    %50 = arith.truncf %49 : vector<4x8x8xf32> to vector<4x8x8xbf16>
    %51 = tpu.transpose %46, [0, 2, 1] : vector<4x8x8xf32> -> vector<4x8x8xf32>
    %52 = arith.truncf %51 : vector<4x8x8xf32> to vector<4x8x8xbf16>
    %53 = tpu.transpose %48, [0, 2, 1] : vector<4x8x8xf32> -> vector<4x8x8xf32>
    %54 = arith.truncf %53 : vector<4x8x8xf32> to vector<4x8x8xbf16>
    "tpu.trace_start"() <{level = 10 : i32, message = "hqd,hkd->hqk"}> : () -> ()
    %cst_19 = arith.constant dense<0.000000e+00> : vector<4x8x8xf32>
    %55 = tpu.matmul %50, %52, %cst_19 {dimension_numbers = #tpu.dot_dimension_numbers<[2], [2], [1], [1], [0, 0, 0, 1, 1, 1], [0], [0]>} : vector<4x8x8xbf16>, vector<4x8x8xbf16>, vector<4x8x8xf32> -> vector<4x8x8xf32>
    "tpu.trace_stop"() : () -> ()
    %cst_20 = arith.constant 0.353553385 : f32
    %56 = vector.broadcast %cst_20 : f32 to vector<4x8x8xf32>
    %57 = arith.mulf %55, %56 : vector<4x8x8xf32>
    %cst_21 = arith.constant dense<0xFF800000> : vector<4x8xf32>
    %58 = vector.multi_reduction <maximumf>, %57, %cst_21 [2] : vector<4x8x8xf32> to vector<4x8xf32>
    %59 = vector.shape_cast %58 : vector<4x8xf32> to vector<4x8x1xf32>
    %60 = vector.broadcast %59 : vector<4x8x1xf32> to vector<4x8x8xf32>
    %61 = arith.subf %57, %60 : vector<4x8x8xf32>
    %62 = math.exp %61 : vector<4x8x8xf32>
    %cst_22 = arith.constant dense<0.000000e+00> : vector<4x8xf32>
    %63 = vector.multi_reduction <add>, %62, %cst_22 [2] : vector<4x8x8xf32> to vector<4x8xf32>
    %64 = vector.shape_cast %63 : vector<4x8xf32> to vector<4x8x1xf32>
    %65 = tpu.reciprocal %64 {approx = true} : vector<4x8x1xf32> -> vector<4x8x1xf32>
    %66 = vector.broadcast %65 : vector<4x8x1xf32> to vector<4x8x8xf32>
    %67 = arith.mulf %62, %66 : vector<4x8x8xf32>
    %68 = arith.truncf %67 : vector<4x8x8xf32> to vector<4x8x8xbf16>
    "tpu.trace_start"() <{level = 10 : i32, message = "hqk,hkd->hqd"}> : () -> ()
    %cst_23 = arith.constant dense<0.000000e+00> : vector<4x8x8xf32>
    %69 = tpu.matmul %68, %54, %cst_23 {dimension_numbers = #tpu.dot_dimension_numbers<[2], [1], [1], [2], [0, 0, 0, 1, 1, 2], [0], [0]>} : vector<4x8x8xbf16>, vector<4x8x8xbf16>, vector<4x8x8xf32> -> vector<4x8x8xf32>
    "tpu.trace_stop"() : () -> ()
    %70 = tpu.transpose %69, [0, 2, 1] : vector<4x8x8xf32> -> vector<4x8x8xf32>
    %71 = vector.shape_cast %70 : vector<4x8x8xf32> to vector<32x8xf32>
    %72 = tpu.transpose %71, [1, 0] : vector<32x8xf32> -> vector<8x32xf32>
    %73 = arith.truncf %72 : vector<8x32xf32> to vector<8x32xbf16>
    %c0_24 = arith.constant 0 : index
    %c0_25 = arith.constant 0 : index
    %c0_26 = arith.constant 0 : index
    %74 = vector.load %arg7[%c0_24, %c0_25, %c0_26] : memref<1x32x32xbf16, #tpu.memory_space<vmem>>, vector<1x32x32xbf16>
    %75 = vector.shape_cast %74 : vector<1x32x32xbf16> to vector<32x32xbf16>
    %cst_27 = arith.constant dense<0.000000e+00> : vector<8x32xf32>
    %76 = tpu.matmul %73, %75, %cst_27 {dimension_numbers = #tpu.dot_dimension_numbers<[1], [0], [0], [1], [0, 0, 1, 1], [], []>} : vector<8x32xbf16>, vector<32x32xbf16>, vector<8x32xf32> -> vector<8x32xf32>
    %77 = vector.broadcast %7 : vector<1x1xf32> to vector<8x32xf32>
    %78 = arith.mulf %76, %77 : vector<8x32xf32>
    %c0_28 = arith.constant 0 : index
    %c0_29 = arith.constant 0 : index
    %c0_30 = arith.constant 0 : index
    %79 = vector.load %arg8[%c0_28, %c0_29, %c0_30] : memref<1x1x32xf32, #tpu.memory_space<vmem>>, vector<1x1x32xf32>
    %80 = vector.shape_cast %79 : vector<1x1x32xf32> to vector<1x32xf32>
    %81 = vector.broadcast %80 : vector<1x32xf32> to vector<8x32xf32>
    %82 = arith.addf %78, %81 : vector<8x32xf32>
    %83 = arith.addf %3, %82 : vector<8x32xf32>
    %c0_31 = arith.constant 0 : index
    %c0_32 = arith.constant 0 : index
    %c0_33 = arith.constant 0 : index
    %84 = vector.load %arg9[%c0_31, %c0_32, %c0_33] : memref<1x1x32xf32, #tpu.memory_space<vmem>>, vector<1x1x32xf32>
    %85 = vector.shape_cast %84 : vector<1x1x32xf32> to vector<1x32xf32>
    %c0_34 = arith.constant 0 : index
    %c0_35 = arith.constant 0 : index
    %c0_36 = arith.constant 0 : index
    %86 = vector.load %arg10[%c0_34, %c0_35, %c0_36] : memref<1x1x32xf32, #tpu.memory_space<vmem>>, vector<1x1x32xf32>
    %87 = vector.shape_cast %86 : vector<1x1x32xf32> to vector<1x32xf32>
    %cst_37 = arith.constant dense<0.000000e+00> : vector<8xf32>
    %88 = vector.multi_reduction <add>, %83, %cst_37 [1] : vector<8x32xf32> to vector<8xf32>
    %89 = vector.shape_cast %88 : vector<8xf32> to vector<8x1xf32>
    %cst_38 = arith.constant 3.200000e+01 : f32
    %90 = vector.broadcast %cst_38 : f32 to vector<8x1xf32>
    %91 = arith.divf %89, %90 : vector<8x1xf32>
    %92 = vector.broadcast %91 : vector<8x1xf32> to vector<8x32xf32>
    %93 = arith.subf %83, %92 : vector<8x32xf32>
    %94 = arith.mulf %93, %93 : vector<8x32xf32>
    %cst_39 = arith.constant dense<0.000000e+00> : vector<8xf32>
    %95 = vector.multi_reduction <add>, %94, %cst_39 [1] : vector<8x32xf32> to vector<8xf32>
    %96 = vector.shape_cast %95 : vector<8xf32> to vector<8x1xf32>
    %cst_40 = arith.constant 3.200000e+01 : f32
    %97 = vector.broadcast %cst_40 : f32 to vector<8x1xf32>
    %98 = arith.divf %96, %97 : vector<8x1xf32>
    %99 = vector.broadcast %91 : vector<8x1xf32> to vector<8x32xf32>
    %100 = arith.subf %83, %99 : vector<8x32xf32>
    %cst_41 = arith.constant 9.99999974E-6 : f32
    %101 = vector.broadcast %cst_41 : f32 to vector<8x1xf32>
    %102 = arith.addf %98, %101 : vector<8x1xf32>
    %103 = math.rsqrt %102 : vector<8x1xf32>
    %104 = vector.broadcast %103 : vector<8x1xf32> to vector<8x32xf32>
    %105 = arith.mulf %100, %104 : vector<8x32xf32>
    %106 = vector.broadcast %85 : vector<1x32xf32> to vector<8x32xf32>
    %107 = arith.mulf %105, %106 : vector<8x32xf32>
    %108 = vector.broadcast %87 : vector<1x32xf32> to vector<8x32xf32>
    %109 = arith.addf %107, %108 : vector<8x32xf32>
    %110 = arith.truncf %109 : vector<8x32xf32> to vector<8x32xbf16>
    %c0_42 = arith.constant 0 : index
    %c0_43 = arith.constant 0 : index
    %c0_44 = arith.constant 0 : index
    %111 = vector.load %arg11[%c0_42, %c0_43, %c0_44] : memref<1x32x64xbf16, #tpu.memory_space<vmem>>, vector<1x32x64xbf16>
    %112 = vector.shape_cast %111 : vector<1x32x64xbf16> to vector<32x64xbf16>
    %cst_45 = arith.constant dense<0.000000e+00> : vector<8x64xf32>
    %113 = tpu.matmul %110, %112, %cst_45 {dimension_numbers = #tpu.dot_dimension_numbers<[1], [0], [0], [1], [0, 0, 1, 1], [], []>} : vector<8x32xbf16>, vector<32x64xbf16>, vector<8x64xf32> -> vector<8x64xf32>
    %114 = vector.broadcast %8 : vector<1x1xf32> to vector<8x64xf32>
    %115 = arith.mulf %113, %114 : vector<8x64xf32>
    %c0_46 = arith.constant 0 : index
    %c0_47 = arith.constant 0 : index
    %c0_48 = arith.constant 0 : index
    %116 = vector.load %arg12[%c0_46, %c0_47, %c0_48] : memref<1x1x64xf32, #tpu.memory_space<vmem>>, vector<1x1x64xf32>
    %117 = vector.shape_cast %116 : vector<1x1x64xf32> to vector<1x64xf32>
    %118 = vector.broadcast %117 : vector<1x64xf32> to vector<8x64xf32>
    %119 = arith.addf %115, %118 : vector<8x64xf32>
    %120 = arith.mulf %119, %119 : vector<8x64xf32>
    %121 = arith.mulf %119, %120 : vector<8x64xf32>
    %cst_49 = arith.constant 4.471500e-02 : f32
    %122 = vector.broadcast %cst_49 : f32 to vector<8x64xf32>
    %123 = arith.mulf %122, %121 : vector<8x64xf32>
    %124 = arith.addf %119, %123 : vector<8x64xf32>
    %cst_50 = arith.constant 0.797884583 : f32
    %125 = vector.broadcast %cst_50 : f32 to vector<8x64xf32>
    %126 = arith.mulf %125, %124 : vector<8x64xf32>
    %127 = math.tanh %126 : vector<8x64xf32>
    %cst_51 = arith.constant 1.000000e+00 : f32
    %128 = vector.broadcast %cst_51 : f32 to vector<8x64xf32>
    %129 = arith.addf %128, %127 : vector<8x64xf32>
    %cst_52 = arith.constant 5.000000e-01 : f32
    %130 = vector.broadcast %cst_52 : f32 to vector<8x64xf32>
    %131 = arith.mulf %130, %129 : vector<8x64xf32>
    %132 = arith.mulf %119, %131 : vector<8x64xf32>
    %133 = arith.truncf %132 : vector<8x64xf32> to vector<8x64xbf16>
    %c0_53 = arith.constant 0 : index
    %c0_54 = arith.constant 0 : index
    %c0_55 = arith.constant 0 : index
    %134 = vector.load %arg13[%c0_53, %c0_54, %c0_55] : memref<1x64x32xbf16, #tpu.memory_space<vmem>>, vector<1x64x32xbf16>
    %135 = vector.shape_cast %134 : vector<1x64x32xbf16> to vector<64x32xbf16>
    %cst_56 = arith.constant dense<0.000000e+00> : vector<8x32xf32>
    %136 = tpu.matmul %133, %135, %cst_56 {dimension_numbers = #tpu.dot_dimension_numbers<[1], [0], [0], [1], [0, 0, 1, 1], [], []>} : vector<8x64xbf16>, vector<64x32xbf16>, vector<8x32xf32> -> vector<8x32xf32>
    %137 = vector.broadcast %9 : vector<1x1xf32> to vector<8x32xf32>
    %138 = arith.mulf %136, %137 : vector<8x32xf32>
    %c0_57 = arith.constant 0 : index
    %c0_58 = arith.constant 0 : index
    %c0_59 = arith.constant 0 : index
    %139 = vector.load %arg14[%c0_57, %c0_58, %c0_59] : memref<1x1x32xf32, #tpu.memory_space<vmem>>, vector<1x1x32xf32>
    %140 = vector.shape_cast %139 : vector<1x1x32xf32> to vector<1x32xf32>
    %141 = vector.broadcast %140 : vector<1x32xf32> to vector<8x32xf32>
    %142 = arith.addf %138, %141 : vector<8x32xf32>
    %143 = arith.addf %83, %142 : vector<8x32xf32>
    %c0_60 = arith.constant 0 : index
    %c0_61 = arith.constant 0 : index
    %144 = vector.load %arg18[%c0_60, %c0_61] : memref<8x32xf32, #tpu.memory_space<vmem>>, vector<8x32xf32>
    tpu.vector_store %arg18[%c0_60, %c0_61], %143 {strides = array<i32>} : memref<8x32xf32, #tpu.memory_space<vmem>>, vector<8x32xf32>,
    %c1_i32 = arith.constant 1 : i32
    %145 = arith.cmpi eq, %arg1, %c1_i32 : i32
    %146 = arith.extui %145 : i1 to i32
    %c0_i32_62 = arith.constant 0 : i32
    %147 = arith.cmpi ne, %146, %c0_i32_62 : i32
    scf.if %147 {
      %c0_63 = arith.constant 0 : index
      %c0_64 = arith.constant 0 : index
      %148 = vector.load %arg15[%c0_63, %c0_64] : memref<1x32xf32, #tpu.memory_space<vmem>>, vector<1x32xf32>
      %c0_65 = arith.constant 0 : index
      %c0_66 = arith.constant 0 : index
      %149 = vector.load %arg16[%c0_65, %c0_66] : memref<1x32xf32, #tpu.memory_space<vmem>>, vector<1x32xf32>
      %cst_67 = arith.constant dense<0.000000e+00> : vector<8xf32>
      %150 = vector.multi_reduction <add>, %143, %cst_67 [1] : vector<8x32xf32> to vector<8xf32>
      %151 = vector.shape_cast %150 : vector<8xf32> to vector<8x1xf32>
      %cst_68 = arith.constant 3.200000e+01 : f32
      %152 = vector.broadcast %cst_68 : f32 to vector<8x1xf32>
      %153 = arith.divf %151, %152 : vector<8x1xf32>
      %154 = vector.broadcast %153 : vector<8x1xf32> to vector<8x32xf32>
      %155 = arith.subf %143, %154 : vector<8x32xf32>
      %156 = arith.mulf %155, %155 : vector<8x32xf32>
      %cst_69 = arith.constant dense<0.000000e+00> : vector<8xf32>
      %157 = vector.multi_reduction <add>, %156, %cst_69 [1] : vector<8x32xf32> to vector<8xf32>
      %158 = vector.shape_cast %157 : vector<8xf32> to vector<8x1xf32>
      %cst_70 = arith.constant 3.200000e+01 : f32
      %159 = vector.broadcast %cst_70 : f32 to vector<8x1xf32>
      %160 = arith.divf %158, %159 : vector<8x1xf32>
      %161 = vector.broadcast %153 : vector<8x1xf32> to vector<8x32xf32>
      %162 = arith.subf %143, %161 : vector<8x32xf32>
      %cst_71 = arith.constant 9.99999974E-6 : f32
      %163 = vector.broadcast %cst_71 : f32 to vector<8x1xf32>
      %164 = arith.addf %160, %163 : vector<8x1xf32>
      %165 = math.rsqrt %164 : vector<8x1xf32>
      %166 = vector.broadcast %165 : vector<8x1xf32> to vector<8x32xf32>
      %167 = arith.mulf %162, %166 : vector<8x32xf32>
      %168 = vector.broadcast %148 : vector<1x32xf32> to vector<8x32xf32>
      %169 = arith.mulf %167, %168 : vector<8x32xf32>
      %170 = vector.broadcast %149 : vector<1x32xf32> to vector<8x32xf32>
      %171 = arith.addf %169, %170 : vector<8x32xf32>
      %c0_72 = arith.constant 0 : index
      %c0_73 = arith.constant 0 : index
      %c0_74 = arith.constant 0 : index
      %172 = vector.load %arg17[%c0_72, %c0_73, %c0_74] : memref<1x8x32xf32, #tpu.memory_space<vmem>>, vector<1x8x32xf32>
      %173 = vector.shape_cast %172 : vector<1x8x32xf32> to vector<8x32xf32>
      %174 = vector.shape_cast %171 : vector<8x32xf32> to vector<1x8x32xf32>
      tpu.vector_store %arg17[%c0_72, %c0_73, %c0_74], %174 {strides = array<i32>} : memref<1x8x32xf32, #tpu.memory_space<vmem>>, vector<1x8x32xf32>,
    } else {
    }
    return
  }
  func.func @transform_0(%arg0: i32, %arg1: i32) -> (i32, i32, i32) {
    %c0_i32 = arith.constant 0 : i32
    %c0_i32_0 = arith.constant 0 : i32
    %c0_i32_1 = arith.constant 0 : i32
    return %arg1, %c0_i32, %c0_i32_0 : i32, i32, i32
  }
  func.func @transform_1(%arg0: i32, %arg1: i32) -> (i32, i32, i32) {
    %c0_i32 = arith.constant 0 : i32
    %c0_i32_0 = arith.constant 0 : i32
    %c0_i32_1 = arith.constant 0 : i32
    return %arg0, %c0_i32, %c0_i32_0 : i32, i32, i32
  }
  func.func @transform_2(%arg0: i32, %arg1: i32) -> (i32, i32, i32) {
    %c0_i32 = arith.constant 0 : i32
    %c0_i32_0 = arith.constant 0 : i32
    %c0_i32_1 = arith.constant 0 : i32
    return %arg1, %c0_i32, %c0_i32_0 : i32, i32, i32
  }
  func.func @transform_3(%arg0: i32, %arg1: i32) -> (i32, i32, i32) {
    %c0_i32 = arith.constant 0 : i32
    %c0_i32_0 = arith.constant 0 : i32
    %c0_i32_1 = arith.constant 0 : i32
    return %arg1, %c0_i32, %c0_i32_0 : i32, i32, i32
  }
  func.func @transform_4(%arg0: i32, %arg1: i32) -> (i32, i32, i32) {
    %c0_i32 = arith.constant 0 : i32
    %c0_i32_0 = arith.constant 0 : i32
    %c0_i32_1 = arith.constant 0 : i32
    return %arg1, %c0_i32, %c0_i32_0 : i32, i32, i32
  }
  func.func @transform_5(%arg0: i32, %arg1: i32) -> (i32, i32, i32) {
    %c0_i32 = arith.constant 0 : i32
    %c0_i32_0 = arith.constant 0 : i32
    %c0_i32_1 = arith.constant 0 : i32
    return %arg1, %c0_i32, %c0_i32_0 : i32, i32, i32
  }
  func.func @transform_6(%arg0: i32, %arg1: i32) -> (i32, i32, i32) {
    %c0_i32 = arith.constant 0 : i32
    %c0_i32_0 = arith.constant 0 : i32
    %c0_i32_1 = arith.constant 0 : i32
    return %arg1, %c0_i32, %c0_i32_0 : i32, i32, i32
  }
  func.func @transform_7(%arg0: i32, %arg1: i32) -> (i32, i32, i32) {
    %c0_i32 = arith.constant 0 : i32
    %c0_i32_0 = arith.constant 0 : i32
    %c0_i32_1 = arith.constant 0 : i32
    return %arg1, %c0_i32, %c0_i32_0 : i32, i32, i32
  }
  func.func @transform_8(%arg0: i32, %arg1: i32) -> (i32, i32, i32) {
    %c0_i32 = arith.constant 0 : i32
    %c0_i32_0 = arith.constant 0 : i32
    %c0_i32_1 = arith.constant 0 : i32
    return %arg1, %c0_i32, %c0_i32_0 : i32, i32, i32
  }
  func.func @transform_9(%arg0: i32, %arg1: i32) -> (i32, i32, i32) {
    %c0_i32 = arith.constant 0 : i32
    %c0_i32_0 = arith.constant 0 : i32
    %c0_i32_1 = arith.constant 0 : i32
    return %arg1, %c0_i32, %c0_i32_0 : i32, i32, i32
  }
  func.func @transform_10(%arg0: i32, %arg1: i32) -> (i32, i32, i32) {
    %c0_i32 = arith.constant 0 : i32
    %c0_i32_0 = arith.constant 0 : i32
    %c0_i32_1 = arith.constant 0 : i32
    return %arg1, %c0_i32, %c0_i32_0 : i32, i32, i32
  }
  func.func @transform_11(%arg0: i32, %arg1: i32) -> (i32, i32, i32) {
    %c0_i32 = arith.constant 0 : i32
    %c0_i32_0 = arith.constant 0 : i32
    %c0_i32_1 = arith.constant 0 : i32
    return %arg1, %c0_i32, %c0_i32_0 : i32, i32, i32
  }
  func.func @transform_12(%arg0: i32, %arg1: i32) -> (i32, i32, i32) {
    %c0_i32 = arith.constant 0 : i32
    %c0_i32_0 = arith.constant 0 : i32
    %c0_i32_1 = arith.constant 0 : i32
    return %arg1, %c0_i32, %c0_i32_0 : i32, i32, i32
  }
  func.func @transform_13(%arg0: i32, %arg1: i32) -> (i32, i32) {
    %c0_i32 = arith.constant 0 : i32
    %c0_i32_0 = arith.constant 0 : i32
    %c0_i32_1 = arith.constant 0 : i32
    return %c0_i32, %c0_i32_0 : i32, i32
  }
  func.func @transform_14(%arg0: i32, %arg1: i32) -> (i32, i32) {
    %c0_i32 = arith.constant 0 : i32
    %c0_i32_0 = arith.constant 0 : i32
    %c0_i32_1 = arith.constant 0 : i32
    return %c0_i32, %c0_i32_0 : i32, i32
  }
  func.func @transform_15(%arg0: i32, %arg1: i32) -> (i32, i32, i32) {
    %c0_i32 = arith.constant 0 : i32
    %c0_i32_0 = arith.constant 0 : i32
    %c0_i32_1 = arith.constant 0 : i32
    return %arg0, %c0_i32, %c0_i32_0 : i32, i32, i32
  }
}

</mosaic_0001>

<llo_original>
// kernel: sparse_ternary_transformer.1
$region0: #{sparse_ternary_transformer.1}
  #allocation0 [shape = 'u32[]', space=smem, size = 0x4, offset = 0x4, fixed_abs, tag = 'smem constant byte address 0x4 - core index']
  #allocation1 [shape = 'u32[144,128]{1,0:T(1,128)}', space=vmem, size = 0x12000, scoped, tag = 'internal scratch']
  #allocation2 [shape = 'f32[8,32]{1,0:T(8,128)}', space=vmem, size = 0x1000, scoped, tag = 'scratch operand']
  %s0 = inlined_call_operand.vmem [shape: f32[2,1,4], index: 0, kind: input, shape index: {}]
  %s1 = inlined_call_operand.vmem [shape: f32[2,8,32], index: 1, kind: input, shape index: {}]
  %s2 = inlined_call_operand.vmem [shape: f32[2,1,32], index: 2, kind: input, shape index: {}]
  %s3 = inlined_call_operand.vmem [shape: f32[2,1,32], index: 3, kind: input, shape index: {}]
  %s4 = inlined_call_operand.vmem [shape: bf16[2,96,32], index: 4, kind: input, shape index: {}]
  %s5 = inlined_call_operand.vmem [shape: bf16[2,32,32], index: 5, kind: input, shape index: {}]
  %s6 = inlined_call_operand.vmem [shape: f32[2,1,32], index: 6, kind: input, shape index: {}]
  %s7 = inlined_call_operand.vmem [shape: f32[2,1,32], index: 7, kind: input, shape index: {}]
  %s8 = inlined_call_operand.vmem [shape: f32[2,1,32], index: 8, kind: input, shape index: {}]
  %s9 = inlined_call_operand.vmem [shape: bf16[2,32,64], index: 9, kind: input, shape index: {}]
  %s10 = inlined_call_operand.vmem [shape: f32[2,1,64], index: 10, kind: input, shape index: {}]
  %s11 = inlined_call_operand.vmem [shape: bf16[2,64,32], index: 11, kind: input, shape index: {}]
  %s12 = inlined_call_operand.vmem [shape: f32[2,1,32], index: 12, kind: input, shape index: {}]
  %s13 = inlined_call_operand.vmem [shape: f32[1,32], index: 13, kind: input, shape index: {}]
  %s14 = inlined_call_operand.vmem [shape: f32[1,32], index: 14, kind: input, shape index: {}]
  %s15 = inlined_call_operand.hbm [shape: f32[2,8,32], index: 15, kind: output, shape index: {}]
  %s16 = sld [smem:[#allocation0]]
  $region101: #{sparse_ternary_transformer.1} parent=0
    _
  %s18 = ssub.s32 1, %s16
  %s19 = scalar_select 0, %s18, %s16
  $region1: #{sparse_ternary_transformer.1} parent=0
    #allocation3 [shape = 'u8[8192]{0}', space=vmem, size = 0x2000, scoped, tag = 'output window, operand 0']
    #allocation4 [shape = 's32[2]{0}', space=sflag, size = 0x8, scoped, tag = 'scoped memory for sparse_ternary_transformer.1']
    %20 = vsyncpa [#allocation4], 0
    %s21 = scalar_lea.sflag [#allocation4], 1
    %22 = vsyncpa %s21, 0
    loop: start=0, step=1, limit=6
    $region2: #{sparse_ternary_transformer.1} parent=1 // loop_pre_header
      _
    $region3: #{sparse_ternary_transformer.1} parent=1 // loop_header
      %s24 = sphi 0, %s28
      %p25 = scmp.ge.s32.totalorder %s24, 6
      %s31 = sphi 0, %s43
      %s32 = sphi 0, %s39
      %s33 = sphi 0, %s31
      %s34 = sphi 0, %s32
      %s35 = sphi 0, %s33
      %s36 = sphi 0, %s34
      %s46 = sphi 0, %s48
      %s49 = sphi 0, %s46
      %s50 = sphi 0, %s49
      %s66 = sphi 0, %s50
      %s72 = sphi 0, %s74
      %s75 = sphi 0, %s72
      %s76 = sphi 0, %s75
      %s92 = sphi 0, %s76
      %s98 = sphi 0, %s100
      %s101 = sphi 0, %s98
      %s102 = sphi 0, %s101
      %s118 = sphi 0, %s102
      %s124 = sphi 0, %s126
      %s127 = sphi 0, %s124
      %s128 = sphi 0, %s127
      %s144 = sphi 0, %s128
      %s150 = sphi 0, %s152
      %s153 = sphi 0, %s150
      %s154 = sphi 0, %s153
      %s170 = sphi 0, %s154
      %s176 = sphi 0, %s178
      %s179 = sphi 0, %s176
      %s180 = sphi 0, %s179
      %s196 = sphi 0, %s180
      %s202 = sphi 0, %s204
      %s205 = sphi 0, %s202
      %s206 = sphi 0, %s205
      %s222 = sphi 0, %s206
      %s228 = sphi 0, %s230
      %s231 = sphi 0, %s228
      %s232 = sphi 0, %s231
      %s248 = sphi 0, %s232
      %s254 = sphi 0, %s256
      %s257 = sphi 0, %s254
      %s258 = sphi 0, %s257
      %s274 = sphi 0, %s258
      %s280 = sphi 0, %s282
      %s283 = sphi 0, %s280
      %s284 = sphi 0, %s283
      %s300 = sphi 0, %s284
      %s306 = sphi 0, %s308
      %s309 = sphi 0, %s306
      %s310 = sphi 0, %s309
      %s326 = sphi 0, %s310
      %s332 = sphi 0, %s334
      %s335 = sphi 0, %s332
      %s336 = sphi 0, %s335
      %s352 = sphi 0, %s336
      %s358 = sphi 0, %s360
      %s361 = sphi 0, %s358
      %s362 = sphi 0, %s361
      %s378 = sphi 0, %s362
      %s382 = sphi 0, %s382
      %s384 = sphi 0, %s382
      %s385 = sphi 0, %s384
      %s399 = sphi 0, %s385
      %s403 = sphi 0, %s403
      %s405 = sphi 0, %s403
      %s406 = sphi 0, %s405
      %s420 = sphi 0, %s406
      %s426 = sphi 0, %s428
      %s429 = sphi 0, %s426
      %s430 = sphi 0, %s429
      %s446 = sphi 0, %s430
    $region4: #{sparse_ternary_transformer.1} parent=1 // loop_header_branch
      %27 = sbr.rel (%p25) target = $region8
    $region5: #{sparse_ternary_transformer.1} parent=1 // loop_body
      %s29 = ssub.s32 %s24, 1
      %s30 = ssub.s32 %s24, 2
      %s37 = sadd.s32 1, %s32
      %p38 = scmp.ge.s32.totalorder %s37, 2
      %s39 = scalar_select %p38, 0, %s37
      %s40 = sadd.s32 1, %s31
      %s41 = scalar_select %p38, %s40, %s31
      %p42 = scmp.ge.s32.totalorder %s41, 2
      %s43 = scalar_select %p42, 0, %s41
      %s44 = ssub.s32 %s32, %s39
      %p45 = scmp.eq.s32.totalorder %s44, 0
      %s47 = sadd.s32 %s46, 1
      %s48 = scalar_select %p45, %s46, %s47
      %p51 = pneg %p45
      %p52 = scmp.eq.s32.totalorder %s24, 3
      %p53 = por %p51, %p52
      %p54 = scmp.ne.s32.totalorder %s46, %s49
      %p55 = scmp.eq.s32.totalorder %s24, 0
      %p56 = por %p54, %p55
      %p57 = scmp.ne.s32.totalorder %s46, %s49
      %p58 = scmp.eq.s32.totalorder %s29, 3
      %p59 = por %p57, %p58
      %p60 = scmp.ne.s32.totalorder %s49, %s50
      %p61 = scmp.eq.s32.totalorder %s29, 0
      %p62 = por %p60, %p61
      %p63 = scmp.ne.s32.totalorder %s49, %s50
      %p64 = scmp.eq.s32.totalorder %s30, 3
      %p65 = por %p63, %p64
      %p67 = scmp.ne.s32.totalorder %s50, %s66
      %p68 = scmp.eq.s32.totalorder %s30, 0
      %p69 = por %p67, %p68
      %s70 = ssub.s32 %s31, %s43
      %p71 = scmp.eq.s32.totalorder %s70, 0
      %s73 = sadd.s32 %s72, 1
      %s74 = scalar_select %p71, %s72, %s73
      %p77 = pneg %p71
      %p78 = scmp.eq.s32.totalorder %s24, 3
      %p79 = por %p77, %p78
      %p80 = scmp.ne.s32.totalorder %s72, %s75
      %p81 = scmp.eq.s32.totalorder %s24, 0
      %p82 = por %p80, %p81
      %p83 = scmp.ne.s32.totalorder %s72, %s75
      %p84 = scmp.eq.s32.totalorder %s29, 3
      %p85 = por %p83, %p84
      %p86 = scmp.ne.s32.totalorder %s75, %s76
      %p87 = scmp.eq.s32.totalorder %s29, 0
      %p88 = por %p86, %p87
      %p89 = scmp.ne.s32.totalorder %s75, %s76
      %p90 = scmp.eq.s32.totalorder %s30, 3
      %p91 = por %p89, %p90
      %p93 = scmp.ne.s32.totalorder %s76, %s92
      %p94 = scmp.eq.s32.totalorder %s30, 0
      %p95 = por %p93, %p94
      %s96 = ssub.s32 %s32, %s39
      %p97 = scmp.eq.s32.totalorder %s96, 0
      %s99 = sadd.s32 %s98, 1
      %s100 = scalar_select %p97, %s98, %s99
      %p103 = pneg %p97
      %p104 = scmp.eq.s32.totalorder %s24, 3
      %p105 = por %p103, %p104
      %p106 = scmp.ne.s32.totalorder %s98, %s101
      %p107 = scmp.eq.s32.totalorder %s24, 0
      %p108 = por %p106, %p107
      %p109 = scmp.ne.s32.totalorder %s98, %s101
      %p110 = scmp.eq.s32.totalorder %s29, 3
      %p111 = por %p109, %p110
      %p112 = scmp.ne.s32.totalorder %s101, %s102
      %p113 = scmp.eq.s32.totalorder %s29, 0
      %p114 = por %p112, %p113
      %p115 = scmp.ne.s32.totalorder %s101, %s102
      %p116 = scmp.eq.s32.totalorder %s30, 3
      %p117 = por %p115, %p116
      %p119 = scmp.ne.s32.totalorder %s102, %s118
      %p120 = scmp.eq.s32.totalorder %s30, 0
      %p121 = por %p119, %p120
      %s122 = ssub.s32 %s32, %s39
      %p123 = scmp.eq.s32.totalorder %s122, 0
      %s125 = sadd.s32 %s124, 1
      %s126 = scalar_select %p123, %s124, %s125
      %p129 = pneg %p123
      %p130 = scmp.eq.s32.totalorder %s24, 3
      %p131 = por %p129, %p130
      %p132 = scmp.ne.s32.totalorder %s124, %s127
      %p133 = scmp.eq.s32.totalorder %s24, 0
      %p134 = por %p132, %p133
      %p135 = scmp.ne.s32.totalorder %s124, %s127
      %p136 = scmp.eq.s32.totalorder %s29, 3
      %p137 = por %p135, %p136
      %p138 = scmp.ne.s32.totalorder %s127, %s128
      %p139 = scmp.eq.s32.totalorder %s29, 0
      %p140 = por %p138, %p139
      %p141 = scmp.ne.s32.totalorder %s127, %s128
      %p142 = scmp.eq.s32.totalorder %s30, 3
      %p143 = por %p141, %p142
      %p145 = scmp.ne.s32.totalorder %s128, %s144
      %p146 = scmp.eq.s32.totalorder %s30, 0
      %p147 = por %p145, %p146
      %s148 = ssub.s32 %s32, %s39
      %p149 = scmp.eq.s32.totalorder %s148, 0
      %s151 = sadd.s32 %s150, 1
      %s152 = scalar_select %p149, %s150, %s151
      %p155 = pneg %p149
      %p156 = scmp.eq.s32.totalorder %s24, 3
      %p157 = por %p155, %p156
      %p158 = scmp.ne.s32.totalorder %s150, %s153
      %p159 = scmp.eq.s32.totalorder %s24, 0
      %p160 = por %p158, %p159
      %p161 = scmp.ne.s32.totalorder %s150, %s153
      %p162 = scmp.eq.s32.totalorder %s29, 3
      %p163 = por %p161, %p162
      %p164 = scmp.ne.s32.totalorder %s153, %s154
      %p165 = scmp.eq.s32.totalorder %s29, 0
      %p166 = por %p164, %p165
      %p167 = scmp.ne.s32.totalorder %s153, %s154
      %p168 = scmp.eq.s32.totalorder %s30, 3
      %p169 = por %p167, %p168
      %p171 = scmp.ne.s32.totalorder %s154, %s170
      %p172 = scmp.eq.s32.totalorder %s30, 0
      %p173 = por %p171, %p172
      %s174 = ssub.s32 %s32, %s39
      %p175 = scmp.eq.s32.totalorder %s174, 0
      %s177 = sadd.s32 %s176, 1
      %s178 = scalar_select %p175, %s176, %s177
      %p181 = pneg %p175
      %p182 = scmp.eq.s32.totalorder %s24, 3
      %p183 = por %p181, %p182
      %p184 = scmp.ne.s32.totalorder %s176, %s179
      %p185 = scmp.eq.s32.totalorder %s24, 0
      %p186 = por %p184, %p185
      %p187 = scmp.ne.s32.totalorder %s176, %s179
      %p188 = scmp.eq.s32.totalorder %s29, 3
      %p189 = por %p187, %p188
      %p190 = scmp.ne.s32.totalorder %s179, %s180
      %p191 = scmp.eq.s32.totalorder %s29, 0
      %p192 = por %p190, %p191
      %p193 = scmp.ne.s32.totalorder %s179, %s180
      %p194 = scmp.eq.s32.totalorder %s30, 3
      %p195 = por %p193, %p194
      %p197 = scmp.ne.s32.totalorder %s180, %s196
      %p198 = scmp.eq.s32.totalorder %s30, 0
      %p199 = por %p197, %p198
      %s200 = ssub.s32 %s32, %s39
      %p201 = scmp.eq.s32.totalorder %s200, 0
      %s203 = sadd.s32 %s202, 1
      %s204 = scalar_select %p201, %s202, %s203
      %p207 = pneg %p201
      %p208 = scmp.eq.s32.totalorder %s24, 3
      %p209 = por %p207, %p208
      %p210 = scmp.ne.s32.totalorder %s202, %s205
      %p211 = scmp.eq.s32.totalorder %s24, 0
      %p212 = por %p210, %p211
      %p213 = scmp.ne.s32.totalorder %s202, %s205
      %p214 = scmp.eq.s32.totalorder %s29, 3
      %p215 = por %p213, %p214
      %p216 = scmp.ne.s32.totalorder %s205, %s206
      %p217 = scmp.eq.s32.totalorder %s29, 0
      %p218 = por %p216, %p217
      %p219 = scmp.ne.s32.totalorder %s205, %s206
      %p220 = scmp.eq.s32.totalorder %s30, 3
      %p221 = por %p219, %p220
      %p223 = scmp.ne.s32.totalorder %s206, %s222
      %p224 = scmp.eq.s32.totalorder %s30, 0
      %p225 = por %p223, %p224
      %s226 = ssub.s32 %s32, %s39
      %p227 = scmp.eq.s32.totalorder %s226, 0
      %s229 = sadd.s32 %s228, 1
      %s230 = scalar_select %p227, %s228, %s229
      %p233 = pneg %p227
      %p234 = scmp.eq.s32.totalorder %s24, 3
      %p235 = por %p233, %p234
      %p236 = scmp.ne.s32.totalorder %s228, %s231
      %p237 = scmp.eq.s32.totalorder %s24, 0
      %p238 = por %p236, %p237
      %p239 = scmp.ne.s32.totalorder %s228, %s231
      %p240 = scmp.eq.s32.totalorder %s29, 3
      %p241 = por %p239, %p240
      %p242 = scmp.ne.s32.totalorder %s231, %s232
      %p243 = scmp.eq.s32.totalorder %s29, 0
      %p244 = por %p242, %p243
      %p245 = scmp.ne.s32.totalorder %s231, %s232
      %p246 = scmp.eq.s32.totalorder %s30, 3
      %p247 = por %p245, %p246
      %p249 = scmp.ne.s32.totalorder %s232, %s248
      %p250 = scmp.eq.s32.totalorder %s30, 0
      %p251 = por %p249, %p250
      %s252 = ssub.s32 %s32, %s39
      %p253 = scmp.eq.s32.totalorder %s252, 0
      %s255 = sadd.s32 %s254, 1
      %s256 = scalar_select %p253, %s254, %s255
      %p259 = pneg %p253
      %p260 = scmp.eq.s32.totalorder %s24, 3
      %p261 = por %p259, %p260
      %p262 = scmp.ne.s32.totalorder %s254, %s257
      %p263 = scmp.eq.s32.totalorder %s24, 0
      %p264 = por %p262, %p263
      %p265 = scmp.ne.s32.totalorder %s254, %s257
      %p266 = scmp.eq.s32.totalorder %s29, 3
      %p267 = por %p265, %p266
      %p268 = scmp.ne.s32.totalorder %s257, %s258
      %p269 = scmp.eq.s32.totalorder %s29, 0
      %p270 = por %p268, %p269
      %p271 = scmp.ne.s32.totalorder %s257, %s258
      %p272 = scmp.eq.s32.totalorder %s30, 3
      %p273 = por %p271, %p272
      %p275 = scmp.ne.s32.totalorder %s258, %s274
      %p276 = scmp.eq.s32.totalorder %s30, 0
      %p277 = por %p275, %p276
      %s278 = ssub.s32 %s32, %s39
      %p279 = scmp.eq.s32.totalorder %s278, 0
      %s281 = sadd.s32 %s280, 1
      %s282 = scalar_select %p279, %s280, %s281
      %p285 = pneg %p279
      %p286 = scmp.eq.s32.totalorder %s24, 3
      %p287 = por %p285, %p286
      %p288 = scmp.ne.s32.totalorder %s280, %s283
      %p289 = scmp.eq.s32.totalorder %s24, 0
      %p290 = por %p288, %p289
      %p291 = scmp.ne.s32.totalorder %s280, %s283
      %p292 = scmp.eq.s32.totalorder %s29, 3
      %p293 = por %p291, %p292
      %p294 = scmp.ne.s32.totalorder %s283, %s284
      %p295 = scmp.eq.s32.totalorder %s29, 0
      %p296 = por %p294, %p295
      %p297 = scmp.ne.s32.totalorder %s283, %s284
      %p298 = scmp.eq.s32.totalorder %s30, 3
      %p299 = por %p297, %p298
      %p301 = scmp.ne.s32.totalorder %s284, %s300
      %p302 = scmp.eq.s32.totalorder %s30, 0
      %p303 = por %p301, %p302
      %s304 = ssub.s32 %s32, %s39
      %p305 = scmp.eq.s32.totalorder %s304, 0
      %s307 = sadd.s32 %s306, 1
      %s308 = scalar_select %p305, %s306, %s307
      %p311 = pneg %p305
      %p312 = scmp.eq.s32.totalorder %s24, 3
      %p313 = por %p311, %p312
      %p314 = scmp.ne.s32.totalorder %s306, %s309
      %p315 = scmp.eq.s32.totalorder %s24, 0
      %p316 = por %p314, %p315
      %p317 = scmp.ne.s32.totalorder %s306, %s309
      %p318 = scmp.eq.s32.totalorder %s29, 3
      %p319 = por %p317, %p318
      %p320 = scmp.ne.s32.totalorder %s309, %s310
      %p321 = scmp.eq.s32.totalorder %s29, 0
      %p322 = por %p320, %p321
      %p323 = scmp.ne.s32.totalorder %s309, %s310
      %p324 = scmp.eq.s32.totalorder %s30, 3
      %p325 = por %p323, %p324
      %p327 = scmp.ne.s32.totalorder %s310, %s326
      %p328 = scmp.eq.s32.totalorder %s30, 0
      %p329 = por %p327, %p328
      %s330 = ssub.s32 %s32, %s39
      %p331 = scmp.eq.s32.totalorder %s330, 0
      %s333 = sadd.s32 %s332, 1
      %s334 = scalar_select %p331, %s332, %s333
      %p337 = pneg %p331
      %p338 = scmp.eq.s32.totalorder %s24, 3
      %p339 = por %p337, %p338
      %p340 = scmp.ne.s32.totalorder %s332, %s335
      %p341 = scmp.eq.s32.totalorder %s24, 0
      %p342 = por %p340, %p341
      %p343 = scmp.ne.s32.totalorder %s332, %s335
      %p344 = scmp.eq.s32.totalorder %s29, 3
      %p345 = por %p343, %p344
      %p346 = scmp.ne.s32.totalorder %s335, %s336
      %p347 = scmp.eq.s32.totalorder %s29, 0
      %p348 = por %p346, %p347
      %p349 = scmp.ne.s32.totalorder %s335, %s336
      %p350 = scmp.eq.s32.totalorder %s30, 3
      %p351 = por %p349, %p350
      %p353 = scmp.ne.s32.totalorder %s336, %s352
      %p354 = scmp.eq.s32.totalorder %s30, 0
      %p355 = por %p353, %p354
      %s356 = ssub.s32 %s32, %s39
      %p357 = scmp.eq.s32.totalorder %s356, 0
      %s359 = sadd.s32 %s358, 1
      %s360 = scalar_select %p357, %s358, %s359
      %p363 = pneg %p357
      %p364 = scmp.eq.s32.totalorder %s24, 3
      %p365 = por %p363, %p364
      %p366 = scmp.ne.s32.totalorder %s358, %s361
      %p367 = scmp.eq.s32.totalorder %s24, 0
      %p368 = por %p366, %p367
      %p369 = scmp.ne.s32.totalorder %s358, %s361
      %p370 = scmp.eq.s32.totalorder %s29, 3
      %p371 = por %p369, %p370
      %p372 = scmp.ne.s32.totalorder %s361, %s362
      %p373 = scmp.eq.s32.totalorder %s29, 0
      %p374 = por %p372, %p373
      %p375 = scmp.ne.s32.totalorder %s361, %s362
      %p376 = scmp.eq.s32.totalorder %s30, 3
      %p377 = por %p375, %p376
      %p379 = scmp.ne.s32.totalorder %s362, %s378
      %p380 = scmp.eq.s32.totalorder %s30, 0
      %p381 = por %p379, %p380
      %s383 = sadd.s32 %s382, 1
      %p386 = scmp.eq.s32.totalorder %s24, 3
      %p387 = scmp.ne.s32.totalorder %s382, %s384
      %p388 = scmp.eq.s32.totalorder %s24, 0
      %p389 = por %p387, %p388
      %p390 = scmp.ne.s32.totalorder %s382, %s384
      %p391 = scmp.eq.s32.totalorder %s29, 3
      %p392 = por %p390, %p391
      %p393 = scmp.ne.s32.totalorder %s384, %s385
      %p394 = scmp.eq.s32.totalorder %s29, 0
      %p395 = por %p393, %p394
      %p396 = scmp.ne.s32.totalorder %s384, %s385
      %p397 = scmp.eq.s32.totalorder %s30, 3
      %p398 = por %p396, %p397
      %p400 = scmp.ne.s32.totalorder %s385, %s399
      %p401 = scmp.eq.s32.totalorder %s30, 0
      %p402 = por %p400, %p401
      %s404 = sadd.s32 %s403, 1
      %p407 = scmp.eq.s32.totalorder %s24, 3
      %p408 = scmp.ne.s32.totalorder %s403, %s405
      %p409 = scmp.eq.s32.totalorder %s24, 0
      %p410 = por %p408, %p409
      %p411 = scmp.ne.s32.totalorder %s403, %s405
      %p412 = scmp.eq.s32.totalorder %s29, 3
      %p413 = por %p411, %p412
      %p414 = scmp.ne.s32.totalorder %s405, %s406
      %p415 = scmp.eq.s32.totalorder %s29, 0
      %p416 = por %p414, %p415
      %p417 = scmp.ne.s32.totalorder %s405, %s406
      %p418 = scmp.eq.s32.totalorder %s30, 3
      %p419 = por %p417, %p418
      %p421 = scmp.ne.s32.totalorder %s406, %s420
      %p422 = scmp.eq.s32.totalorder %s30, 0
      %p423 = por %p421, %p422
      %s424 = ssub.s32 %s31, %s43
      %p425 = scmp.eq.s32.totalorder %s424, 0
      %s427 = sadd.s32 %s426, 1
      %s428 = scalar_select %p425, %s426, %s427
      %p431 = pneg %p425
      %p432 = scmp.eq.s32.totalorder %s24, 3
      %p433 = por %p431, %p432
      %p434 = scmp.ne.s32.totalorder %s426, %s429
      %p435 = scmp.eq.s32.totalorder %s24, 0
      %p436 = por %p434, %p435
      %p437 = scmp.ne.s32.totalorder %s426, %s429
      %p438 = scmp.eq.s32.totalorder %s29, 3
      %p439 = por %p437, %p438
      %p440 = scmp.ne.s32.totalorder %s429, %s430
      %p441 = scmp.eq.s32.totalorder %s29, 0
      %p442 = por %p440, %p441
      %p443 = scmp.ne.s32.totalorder %s429, %s430
      %p444 = scmp.eq.s32.totalorder %s30, 3
      %p445 = por %p443, %p444
      %p447 = scmp.ne.s32.totalorder %s430, %s446
      %p448 = scmp.eq.s32.totalorder %s30, 0
      %p449 = por %p447, %p448
      %p450 = scmp.le.s32.totalorder 1, %s24
      %p451 = scmp.lt.s32.totalorder %s24, 5
      %p452 = pnand %p450, %p451
      %p453 = pneg %p452
      // Predicated region
      $region9: #{sparse_ternary_transformer.1} parent=5 // pred_check
        _
      $region10: #{sparse_ternary_transformer.1} parent=5 // pred_check_branch
        %455 = sbr.rel (%p452) target = $region12
      $region11: #{sparse_ternary_transformer.1} parent=5 // pred_region
        %s456 = ssub.s32 %s24, 1
        // Predicated region
        $region13: #{sparse_ternary_transformer.1} parent=11 // pred_check
          %p457 = pneg %p395
        $region14: #{sparse_ternary_transformer.1} parent=11 // pred_check_branch
          %459 = sbr.rel (%p457) target = $region16
        $region15: #{sparse_ternary_transformer.1} parent=11 // pred_region
          _
        $region16: #{sparse_ternary_transformer.1} parent=11 // pred_fallthru
          _
        // Predicated region
        $region17: #{sparse_ternary_transformer.1} parent=11 // pred_check
          %p460 = pneg %p416
        $region18: #{sparse_ternary_transformer.1} parent=11 // pred_check_branch
          %462 = sbr.rel (%p460) target = $region20
        $region19: #{sparse_ternary_transformer.1} parent=11 // pred_region
          _
        $region20: #{sparse_ternary_transformer.1} parent=11 // pred_fallthru
          _
      $region12: #{sparse_ternary_transformer.1} parent=5 // pred_fallthru
        _
      %p463 = scmp.lt.s32.totalorder %s24, 4
      // Predicated region
      $region21: #{sparse_ternary_transformer.1} parent=5 // pred_check
        %p464 = pneg %p463
      $region22: #{sparse_ternary_transformer.1} parent=5 // pred_check_branch
        %466 = sbr.rel (%p464) target = $region24
      $region23: #{sparse_ternary_transformer.1} parent=5 // pred_region
        // Predicated region
        $region25: #{sparse_ternary_transformer.1} parent=23 // pred_check
          %p467 = pneg %p56
        $region26: #{sparse_ternary_transformer.1} parent=23 // pred_check_branch
          %469 = sbr.rel (%p467) target = $region28
        $region27: #{sparse_ternary_transformer.1} parent=23 // pred_region
          %p470 = scmp.lt.s32.totalorder %s32, 1
          %s471 = scalar_select %p470, %s32, 1
          %s472 = scalar_lea.vmem %s0, %s471
        $region28: #{sparse_ternary_transformer.1} parent=23 // pred_fallthru
          _
        // Predicated region
        $region29: #{sparse_ternary_transformer.1} parent=23 // pred_check
          %p473 = pneg %p82
        $region30: #{sparse_ternary_transformer.1} parent=23 // pred_check_branch
          %475 = sbr.rel (%p473) target = $region32
        $region31: #{sparse_ternary_transformer.1} parent=23 // pred_region
          %p476 = scmp.lt.s32.totalorder %s31, 1
          %s477 = scalar_select %p476, %s31, 1
          %s478 = smul.addr %s477, 8
          %s479 = scalar_lea.vmem %s1, %s478
        $region32: #{sparse_ternary_transformer.1} parent=23 // pred_fallthru
          _
        // Predicated region
        $region33: #{sparse_ternary_transformer.1} parent=23 // pred_check
          %p480 = pneg %p108
        $region34: #{sparse_ternary_transformer.1} parent=23 // pred_check_branch
          %482 = sbr.rel (%p480) target = $region36
        $region35: #{sparse_ternary_transformer.1} parent=23 // pred_region
          %p483 = scmp.lt.s32.totalorder %s32, 1
          %s484 = scalar_select %p483, %s32, 1
          %s485 = scalar_lea.vmem %s2, %s484
        $region36: #{sparse_ternary_transformer.1} parent=23 // pred_fallthru
          _
        // Predicated region
        $region37: #{sparse_ternary_transformer.1} parent=23 // pred_check
          %p486 = pneg %p134
        $region38: #{sparse_ternary_transformer.1} parent=23 // pred_check_branch
          %488 = sbr.rel (%p486) target = $region40
        $region39: #{sparse_ternary_transformer.1} parent=23 // pred_region
          %p489 = scmp.lt.s32.totalorder %s32, 1
          %s490 = scalar_select %p489, %s32, 1
          %s491 = scalar_lea.vmem %s3, %s490
        $region40: #{sparse_ternary_transformer.1} parent=23 // pred_fallthru
          _
        // Predicated region
        $region41: #{sparse_ternary_transformer.1} parent=23 // pred_check
          %p492 = pneg %p160
        $region42: #{sparse_ternary_transformer.1} parent=23 // pred_check_branch
          %494 = sbr.rel (%p492) target = $region44
        $region43: #{sparse_ternary_transformer.1} parent=23 // pred_region
          %p495 = scmp.lt.s32.totalorder %s32, 1
          %s496 = scalar_select %p495, %s32, 1
          %s497 = smul.addr %s496, 12
          %s498 = smul.addr %s497, 4
          %s499 = scalar_lea.vmem %s4, %s498
        $region44: #{sparse_ternary_transformer.1} parent=23 // pred_fallthru
          _
        // Predicated region
        $region45: #{sparse_ternary_transformer.1} parent=23 // pred_check
          %p500 = pneg %p186
        $region46: #{sparse_ternary_transformer.1} parent=23 // pred_check_branch
          %502 = sbr.rel (%p500) target = $region48
        $region47: #{sparse_ternary_transformer.1} parent=23 // pred_region
          %p503 = scmp.lt.s32.totalorder %s32, 1
          %s504 = scalar_select %p503, %s32, 1
          %s505 = smul.addr %s504, 4
          %s506 = smul.addr %s505, 4
          %s507 = scalar_lea.vmem %s5, %s506
        $region48: #{sparse_ternary_transformer.1} parent=23 // pred_fallthru
          _
        // Predicated region
        $region49: #{sparse_ternary_transformer.1} parent=23 // pred_check
          %p508 = pneg %p212
        $region50: #{sparse_ternary_transformer.1} parent=23 // pred_check_branch
          %510 = sbr.rel (%p508) target = $region52
        $region51: #{sparse_ternary_transformer.1} parent=23 // pred_region
          %p511 = scmp.lt.s32.totalorder %s32, 1
          %s512 = scalar_select %p511, %s32, 1
          %s513 = scalar_lea.vmem %s6, %s512
        $region52: #{sparse_ternary_transformer.1} parent=23 // pred_fallthru
          _
        // Predicated region
        $region53: #{sparse_ternary_transformer.1} parent=23 // pred_check
          %p514 = pneg %p238
        $region54: #{sparse_ternary_transformer.1} parent=23 // pred_check_branch
          %516 = sbr.rel (%p514) target = $region56
        $region55: #{sparse_ternary_transformer.1} parent=23 // pred_region
          %p517 = scmp.lt.s32.totalorder %s32, 1
          %s518 = scalar_select %p517, %s32, 1
          %s519 = scalar_lea.vmem %s7, %s518
        $region56: #{sparse_ternary_transformer.1} parent=23 // pred_fallthru
          _
        // Predicated region
        $region57: #{sparse_ternary_transformer.1} parent=23 // pred_check
          %p520 = pneg %p264
        $region58: #{sparse_ternary_transformer.1} parent=23 // pred_check_branch
          %522 = sbr.rel (%p520) target = $region60
        $region59: #{sparse_ternary_transformer.1} parent=23 // pred_region
          %p523 = scmp.lt.s32.totalorder %s32, 1
          %s524 = scalar_select %p523, %s32, 1
          %s525 = scalar_lea.vmem %s8, %s524
        $region60: #{sparse_ternary_transformer.1} parent=23 // pred_fallthru
          _
        // Predicated region
        $region61: #{sparse_ternary_transformer.1} parent=23 // pred_check
          %p526 = pneg %p290
        $region62: #{sparse_ternary_transformer.1} parent=23 // pred_check_branch
          %528 = sbr.rel (%p526) target = $region64
        $region63: #{sparse_ternary_transformer.1} parent=23 // pred_region
          %p529 = scmp.lt.s32.totalorder %s32, 1
          %s530 = scalar_select %p529, %s32, 1
          %s531 = smul.addr %s530, 4
          %s532 = smul.addr %s531, 4
          %s533 = scalar_lea.vmem %s9, %s532
        $region64: #{sparse_ternary_transformer.1} parent=23 // pred_fallthru
          _
        // Predicated region
        $region65: #{sparse_ternary_transformer.1} parent=23 // pred_check
          %p534 = pneg %p316
        $region66: #{sparse_ternary_transformer.1} parent=23 // pred_check_branch
          %536 = sbr.rel (%p534) target = $region68
        $region67: #{sparse_ternary_transformer.1} parent=23 // pred_region
          %p537 = scmp.lt.s32.totalorder %s32, 1
          %s538 = scalar_select %p537, %s32, 1
          %s539 = scalar_lea.vmem %s10, %s538
        $region68: #{sparse_ternary_transformer.1} parent=23 // pred_fallthru
          _
        // Predicated region
        $region69: #{sparse_ternary_transformer.1} parent=23 // pred_check
          %p540 = pneg %p342
        $region70: #{sparse_ternary_transformer.1} parent=23 // pred_check_branch
          %542 = sbr.rel (%p540) target = $region72
        $region71: #{sparse_ternary_transformer.1} parent=23 // pred_region
          %p543 = scmp.lt.s32.totalorder %s32, 1
          %s544 = scalar_select %p543, %s32, 1
          %s545 = smul.addr %s544, 8
          %s546 = smul.addr %s545, 4
          %s547 = scalar_lea.vmem %s11, %s546
        $region72: #{sparse_ternary_transformer.1} parent=23 // pred_fallthru
          _
        // Predicated region
        $region73: #{sparse_ternary_transformer.1} parent=23 // pred_check
          %p548 = pneg %p368
        $region74: #{sparse_ternary_transformer.1} parent=23 // pred_check_branch
          %550 = sbr.rel (%p548) target = $region76
        $region75: #{sparse_ternary_transformer.1} parent=23 // pred_region
          %p551 = scmp.lt.s32.totalorder %s32, 1
          %s552 = scalar_select %p551, %s32, 1
          %s553 = scalar_lea.vmem %s12, %s552
        $region76: #{sparse_ternary_transformer.1} parent=23 // pred_fallthru
          _
      $region24: #{sparse_ternary_transformer.1} parent=5 // pred_fallthru
        _
      %p554 = scmp.le.s32.totalorder 1, %s24
      %p555 = scmp.lt.s32.totalorder %s24, 5
      %p556 = pnand %p554, %p555
      %p557 = pneg %p556
      // Predicated region
      $region77: #{sparse_ternary_transformer.1} parent=5 // pred_check
        _
      $region78: #{sparse_ternary_transformer.1} parent=5 // pred_check_branch
        %559 = sbr.rel (%p556) target = $region80
      $region79: #{sparse_ternary_transformer.1} parent=5 // pred_region
        %s560 = ssub.s32 %s24, 1
        %p561 = scmp.lt.s32.totalorder %s34, 1
        %s562 = scalar_select %p561, %s34, 1
        %s563 = scalar_lea.vmem %s0, %s562
        %p564 = pneg %p62
        %p565 = pneg %p59
        %p566 = scmp.lt.s32.totalorder %s33, 1
        %s567 = scalar_select %p566, %s33, 1
        %s568 = smul.addr %s567, 8
        %s569 = scalar_lea.vmem %s1, %s568
        %p570 = pneg %p88
        %p571 = pneg %p85
        %p572 = scmp.lt.s32.totalorder %s34, 1
        %s573 = scalar_select %p572, %s34, 1
        %s574 = scalar_lea.vmem %s2, %s573
        %p575 = pneg %p114
        %p576 = pneg %p111
        %p577 = scmp.lt.s32.totalorder %s34, 1
        %s578 = scalar_select %p577, %s34, 1
        %s579 = scalar_lea.vmem %s3, %s578
        %p580 = pneg %p140
        %p581 = pneg %p137
        %p582 = scmp.lt.s32.totalorder %s34, 1
        %s583 = scalar_select %p582, %s34, 1
        %s584 = smul.addr %s583, 12
        %s585 = smul.addr %s584, 4
        %s586 = scalar_lea.vmem %s4, %s585
        %p587 = pneg %p166
        %p588 = pneg %p163
        %p589 = scmp.lt.s32.totalorder %s34, 1
        %s590 = scalar_select %p589, %s34, 1
        %s591 = smul.addr %s590, 4
        %s592 = smul.addr %s591, 4
        %s593 = scalar_lea.vmem %s5, %s592
        %p594 = pneg %p192
        %p595 = pneg %p189
        %p596 = scmp.lt.s32.totalorder %s34, 1
        %s597 = scalar_select %p596, %s34, 1
        %s598 = scalar_lea.vmem %s6, %s597
        %p599 = pneg %p218
        %p600 = pneg %p215
        %p601 = scmp.lt.s32.totalorder %s34, 1
        %s602 = scalar_select %p601, %s34, 1
        %s603 = scalar_lea.vmem %s7, %s602
        %p604 = pneg %p244
        %p605 = pneg %p241
        %p606 = scmp.lt.s32.totalorder %s34, 1
        %s607 = scalar_select %p606, %s34, 1
        %s608 = scalar_lea.vmem %s8, %s607
        %p609 = pneg %p270
        %p610 = pneg %p267
        %p611 = scmp.lt.s32.totalorder %s34, 1
        %s612 = scalar_select %p611, %s34, 1
        %s613 = smul.addr %s612, 4
        %s614 = smul.addr %s613, 4
        %s615 = scalar_lea.vmem %s9, %s614
        %p616 = pneg %p296
        %p617 = pneg %p293
        %p618 = scmp.lt.s32.totalorder %s34, 1
        %s619 = scalar_select %p618, %s34, 1
        %s620 = scalar_lea.vmem %s10, %s619
        %p621 = pneg %p322
        %p622 = pneg %p319
        %p623 = scmp.lt.s32.totalorder %s34, 1
        %s624 = scalar_select %p623, %s34, 1
        %s625 = smul.addr %s624, 8
        %s626 = smul.addr %s625, 4
        %s627 = scalar_lea.vmem %s11, %s626
        %p628 = pneg %p348
        %p629 = pneg %p345
        %p630 = scmp.lt.s32.totalorder %s34, 1
        %s631 = scalar_select %p630, %s34, 1
        %s632 = scalar_lea.vmem %s12, %s631
        %p633 = pneg %p374
        %p634 = pneg %p371
        %p635 = pneg %p395
        %p636 = pneg %p392
        %p637 = pneg %p416
        %p638 = pneg %p413
        %p639 = pneg %p442
        %p640 = pneg %p439
        %s641 = sand.u32 %s429, 1
        %s642 = scalar_lea.sflag [#allocation4], %s641
        %s643 = sand.u32 %s429, 1
        %s644 = smul.addr %s643, 8
        %s645 = scalar_lea.vmem [#allocation3], %s644
        %p646 = scmp.lt.s32.totalorder %s34, 1
        %s647 = scalar_select %p646, %s34, 1
        %s648 = scalar_lea.vmem %s0, %s647
        %p649 = scmp.lt.s32.totalorder %s33, 1
        %s650 = scalar_select %p649, %s33, 1
        %s651 = smul.addr %s650, 8
        %s652 = scalar_lea.vmem %s1, %s651
        %p653 = scmp.lt.s32.totalorder %s34, 1
        %s654 = scalar_select %p653, %s34, 1
        %s655 = scalar_lea.vmem %s2, %s654
        %p656 = scmp.lt.s32.totalorder %s34, 1
        %s657 = scalar_select %p656, %s34, 1
        %s658 = scalar_lea.vmem %s3, %s657
        %p659 = scmp.lt.s32.totalorder %s34, 1
        %s660 = scalar_select %p659, %s34, 1
        %s661 = smul.addr %s660, 12
        %s662 = smul.addr %s661, 4
        %s663 = scalar_lea.vmem %s4, %s662
        %p664 = scmp.lt.s32.totalorder %s34, 1
        %s665 = scalar_select %p664, %s34, 1
        %s666 = smul.addr %s665, 4
        %s667 = smul.addr %s666, 4
        %s668 = scalar_lea.vmem %s5, %s667
        %p669 = scmp.lt.s32.totalorder %s34, 1
        %s670 = scalar_select %p669, %s34, 1
        %s671 = scalar_lea.vmem %s6, %s670
        %p672 = scmp.lt.s32.totalorder %s34, 1
        %s673 = scalar_select %p672, %s34, 1
        %s674 = scalar_lea.vmem %s7, %s673
        %p675 = scmp.lt.s32.totalorder %s34, 1
        %s676 = scalar_select %p675, %s34, 1
        %s677 = scalar_lea.vmem %s8, %s676
        %p678 = scmp.lt.s32.totalorder %s34, 1
        %s679 = scalar_select %p678, %s34, 1
        %s680 = smul.addr %s679, 4
        %s681 = smul.addr %s680, 4
        %s682 = scalar_lea.vmem %s9, %s681
        %p683 = scmp.lt.s32.totalorder %s34, 1
        %s684 = scalar_select %p683, %s34, 1
        %s685 = scalar_lea.vmem %s10, %s684
        %p686 = scmp.lt.s32.totalorder %s34, 1
        %s687 = scalar_select %p686, %s34, 1
        %s688 = smul.addr %s687, 8
        %s689 = smul.addr %s688, 4
        %s690 = scalar_lea.vmem %s11, %s689
        %p691 = scmp.lt.s32.totalorder %s34, 1
        %s692 = scalar_select %p691, %s34, 1
        %s693 = scalar_lea.vmem %s12, %s692
        %p695 = scmp.eq.s32.totalorder %s34, 0
        // Predicated region
        $region81: #{sparse_ternary_transformer.1} parent=79 // pred_check
          %p696 = pneg %p695
        $region82: #{sparse_ternary_transformer.1} parent=79 // pred_check_branch
          %698 = sbr.rel (%p696) target = $region84
        $region83: #{sparse_ternary_transformer.1} parent=79 // pred_region
          %v699 = vld [vmem:[%s652] sm:$0xff]
          %vm700 = vcmask 261120
          %701 = vst.msk [vmem:[#allocation2] sm:$0xff] %vm700, %v699
        $region84: #{sparse_ternary_transformer.1} parent=79 // pred_fallthru
          _
        %v702 = vld [vmem:[#allocation2] sm:$0xff]
        %v703 = vld [vmem:[%s648] sm:$0x1]
        %v704 = vld [vmem:[%s655] sm:$0x1]
        %v705 = vld [vmem:[%s658] sm:$0x1]
        %vm706 = vcmask 261120
        %v707 = vsel %vm706, %v702, 0.0
        %708 = vadd.xlane.f32.xlu0 %v707
        %v709 = vpop.xlane.xlu0 %708
        %v710 = vrcp.pop 32.0
        %v711 = vmul.f32 %v709, %v710
        %v712 = vsub.f32 %v702, %v711
        %v713 = vmul.f32 %v712, %v712
        %v714 = vsel %vm706, %v713, 0.0
        %715 = vadd.xlane.f32.xlu0 %v714
        %v716 = vpop.xlane.xlu0 %715
        %v717 = vmul.f32 %v716, %v710
        %v718 = vadd.f32 %v717, 1e-05
        %v719 = vrsqrt.pop %v718
        %v720 = vmul.f32 %v712, %v719
        %v722 = vlaneseq
        %v723 = vshrl.u32 %v722, 7
        %v724 = vsub.s32 0, %v723
        %v725 = vrot.slane %v704, %v724
        %v727 = vmul.f32 %v720, %v725
        %v729 = vlaneseq
        %v730 = vshrl.u32 %v729, 7
        %v731 = vsub.s32 0, %v730
        %v732 = vrot.slane %v705, %v731
        %v734 = vadd.f32 %v727, %v732
        %735 = vxpose.xlu0.b32.start [1/16] %v734, 128
        %736 = vxpose.xlu0.b32.cont [2/16] 0.0, 128
        %737 = vxpose.xlu0.b32.cont [3/16] 0.0, 128
        %738 = vxpose.xlu0.b32.cont [4/16] 0.0, 128
        %739 = vxpose.xlu0.b32.cont [5/16] 0.0, 128
        %740 = vxpose.xlu0.b32.cont [6/16] 0.0, 128
        %741 = vxpose.xlu0.b32.cont [7/16] 0.0, 128
        %742 = vxpose.xlu0.b32.cont [8/16] 0.0, 128
        %743 = vxpose.xlu0.b32.cont [9/16] 0.0, 128
        %744 = vxpose.xlu0.b32.cont [10/16] 0.0, 128
        %745 = vxpose.xlu0.b32.cont [11/16] 0.0, 128
        %746 = vxpose.xlu0.b32.cont [12/16] 0.0, 128
        %747 = vxpose.xlu0.b32.cont [13/16] 0.0, 128
        %748 = vxpose.xlu0.b32.cont [14/16] 0.0, 128
        %749 = vxpose.xlu0.b32.cont [15/16] 0.0, 128
        %750 = vxpose.xlu0.b32.end [16/16] 0.0, 128
        %v751 = vpop.trf.xlu0
        %v752 = vpop.trf.xlu0
        %v753 = vpop.trf.xlu0
        %v754 = vpop.trf.xlu0
        %v755 = vpop.trf.xlu0
        %v756 = vpop.trf.xlu0
        %v757 = vpop.trf.xlu0
        %v758 = vpop.trf.xlu0
        %v759 = vpop.trf.xlu0
        %v760 = vpop.trf.xlu0
        %v761 = vpop.trf.xlu0
        %v762 = vpop.trf.xlu0
        %v763 = vpop.trf.xlu0
        %v764 = vpop.trf.xlu0
        %v765 = vpop.trf.xlu0
        %v766 = vpop.trf.xlu0
        %v767 = vpack.c.bf16 %v752, %v751
        %v768 = vpack.c.bf16 %v754, %v753
        %v769 = vld [vmem:[%s663] sm:$0xf]
        %v770 = vld [vmem:[%s663 + $0x4] sm:$0xf]
        %v771 = vld [vmem:[%s663 + $0x8] sm:$0xf]
        %v772 = vld [vmem:[%s663 + $0xc] sm:$0xf]
        %v773 = vld [vmem:[%s663 + $0x10] sm:$0xf]
        %v774 = vld [vmem:[%s663 + $0x14] sm:$0xf]
        %v775 = vld [vmem:[%s663 + $0x18] sm:$0xf]
        %v776 = vld [vmem:[%s663 + $0x1c] sm:$0xf]
        %v777 = vld [vmem:[%s663 + $0x20] sm:$0xf]
        %v778 = vld [vmem:[%s663 + $0x24] sm:$0xf]
        %v779 = vld [vmem:[%s663 + $0x28] sm:$0xf]
        %v780 = vld [vmem:[%s663 + $0x2c] sm:$0xf]
        %v793 = vunpack.c.l.b16 %v769
        %v794 = vunpack.c.l.b16 %v770
        %v795 = vunpack.c.l.b16 %v771
        %v796 = vunpack.c.l.b16 %v772
        %v797 = vunpack.c.l.b16 %v773
        %v798 = vunpack.c.l.b16 %v774
        %v799 = vunpack.c.l.b16 %v775
        %v800 = vunpack.c.l.b16 %v776
        %v801 = vunpack.c.l.b16 %v777
        %v802 = vunpack.c.l.b16 %v778
        %v803 = vunpack.c.l.b16 %v779
        %v804 = vunpack.c.l.b16 %v780
        %v805 = vpack.c.b16 %v794, %v793
        %v806 = vpack.c.b16 %v796, %v795
        %v807 = vpack.c.b16 %v798, %v797
        %v808 = vpack.c.b16 %v800, %v799
        %v809 = vpack.c.b16 %v802, %v801
        %v810 = vpack.c.b16 %v804, %v803
        %v812 = vsel %vm706, %v805, 0
        %v815 = vsel %vm706, %v806, 0
        %v818 = vsel %vm706, %v807, 0
        %v821 = vsel %vm706, %v808, 0
        %v824 = vsel %vm706, %v809, 0
        %v827 = vsel %vm706, %v810, 0
        %829 = vmatprep.subr.bf16.mxu0 0
        %830 = vmatpush1.bf16.msra.mxu0 0
        %831 = vmatprep.subr.bf16.mxu0 0
        %832 = vmatpush1.bf16.msra.mxu0 0
        %833 = vmatprep.subr.bf16.mxu0 0
        %834 = vmatpush1.bf16.msra.mxu0 0
        %835 = vmatprep.subr.bf16.mxu0 0
        %836 = vmatpush1.bf16.msra.mxu0 0
        %837 = vmatprep.subr.bf16.mxu0 0
        %838 = vmatpush1.bf16.msra.mxu0 0
        %839 = vmatprep.subr.bf16.mxu0 0
        %840 = vmatpush1.bf16.msra.mxu0 0
        %841 = vmatprep.subr.bf16.mxu0 0
        %842 = vmatpush1.bf16.msra.mxu0 %v768
        %843 = vmatprep.subr.bf16.mxu0 0
        %844 = vmatpush1.bf16.msra.mxu0 %v767
        %845 = vmatprep.subr.bf16.mxu0 0
        %846 = vmatpush2.bf16.msra.mxu0 0
        %847 = vmatprep.subr.bf16.mxu0 0
        %848 = vmatpush2.bf16.msra.mxu0 0
        %849 = vmatprep.subr.bf16.mxu0 0
        %850 = vmatpush2.bf16.msra.mxu0 0
        %851 = vmatprep.subr.bf16.mxu0 0
        %852 = vmatpush2.bf16.msra.mxu0 0
        %853 = vmatprep.subr.bf16.mxu0 0
        %854 = vmatpush2.bf16.msra.mxu0 0
        %855 = vmatprep.subr.bf16.mxu0 0
        %856 = vmatpush2.bf16.msra.mxu0 0
        %857 = vmatprep.subr.bf16.mxu0 0
        %858 = vmatpush2.bf16.msra.mxu0 0
        %859 = vmatprep.subr.bf16.mxu0 0
        %860 = vmatpush2.bf16.msra.mxu0 0
        %861 = vmatprep.mubr.bf16.mxu0 0
        %862 = vmatmul.mubr.bf16.gmra.mxu0 %v812
        %v863 = vpop.f32.mrf.mxu0
        %v864 = vadd.f32 0.0, %v863
        %v865 = vpop.f32.mrf.mxu0
        %v866 = vpop.f32.mrf.mxu0
        %v867 = vadd.f32 0.0, %v866
        %v868 = vpop.f32.mrf.mxu0
        %869 = vmatprep.mubr.bf16.mxu0 0
        %870 = vmatmul.mubr.bf16.gmra.mxu0 %v815
        %v871 = vpop.f32.mrf.mxu0
        %v872 = vadd.f32 0.0, %v871
        %v873 = vpop.f32.mrf.mxu0
        %v874 = vpop.f32.mrf.mxu0
        %v875 = vadd.f32 0.0, %v874
        %v876 = vpop.f32.mrf.mxu0
        %877 = vmatprep.mubr.bf16.mxu0 0
        %878 = vmatmul.mubr.bf16.gmra.mxu0 %v818
        %v879 = vpop.f32.mrf.mxu0
        %v880 = vadd.f32 0.0, %v879
        %v881 = vpop.f32.mrf.mxu0
        %v882 = vpop.f32.mrf.mxu0
        %v883 = vadd.f32 0.0, %v882
        %v884 = vpop.f32.mrf.mxu0
        %885 = vmatprep.mubr.bf16.mxu0 0
        %886 = vmatmul.mubr.bf16.gmra.mxu0 %v821
        %v887 = vpop.f32.mrf.mxu0
        %v888 = vadd.f32 0.0, %v887
        %v889 = vpop.f32.mrf.mxu0
        %v890 = vpop.f32.mrf.mxu0
        %v891 = vadd.f32 0.0, %v890
        %v892 = vpop.f32.mrf.mxu0
        %893 = vmatprep.mubr.bf16.mxu0 0
        %894 = vmatmul.mubr.bf16.gmra.mxu0 %v824
        %v895 = vpop.f32.mrf.mxu0
        %v896 = vadd.f32 0.0, %v895
        %v897 = vpop.f32.mrf.mxu0
        %v898 = vpop.f32.mrf.mxu0
        %v899 = vadd.f32 0.0, %v898
        %v900 = vpop.f32.mrf.mxu0
        %901 = vmatprep.mubr.bf16.mxu0 0
        %902 = vmatmul.mubr.bf16.gmra.mxu0 %v827
        %v903 = vpop.f32.mrf.mxu0
        %v904 = vadd.f32 0.0, %v903
        %v905 = vpop.f32.mrf.mxu0
        %v906 = vpop.f32.mrf.mxu0
        %v907 = vadd.f32 0.0, %v906
        %v908 = vpop.f32.mrf.mxu0
        %909 = vdwg.mxu0
        %v911 = vlaneseq
        %v912 = vshrl.u32 %v911, 7
        %v913 = vsub.s32 0, %v912
        %v914 = vrot.slane %v703, %v913
        %915 = vset.pattern.permute.xlu0 0
        %916 = vperm.xlu0 %915, %v914
        %v917 = vpop.permute.xlu0 %916
        %v919 = vmul.f32 %v864, %v917
        %v920 = vmul.f32 %v867, %v917
        %v921 = vmul.f32 %v872, %v917
        %v922 = vmul.f32 %v875, %v917
        %v923 = vmul.f32 %v880, %v917
        %v924 = vmul.f32 %v883, %v917
        %v925 = vmul.f32 %v888, %v917
        %v926 = vmul.f32 %v891, %v917
        %v927 = vmul.f32 %v896, %v917
        %v928 = vmul.f32 %v899, %v917
        %v929 = vmul.f32 %v904, %v917
        %v930 = vmul.f32 %v907, %v917
        %931 = vxpose.xlu0.b32.start [1/16] %v919, 128
        %932 = vxpose.xlu0.b32.cont [2/16] 0.0, 128
        %933 = vxpose.xlu0.b32.cont [3/16] 0.0, 128
        %934 = vxpose.xlu0.b32.cont [4/16] 0.0, 128
        %935 = vxpose.xlu0.b32.cont [5/16] 0.0, 128
        %936 = vxpose.xlu0.b32.cont [6/16] 0.0, 128
        %937 = vxpose.xlu0.b32.cont [7/16] 0.0, 128
        %938 = vxpose.xlu0.b32.cont [8/16] 0.0, 128
        %939 = vxpose.xlu0.b32.cont [9/16] 0.0, 128
        %940 = vxpose.xlu0.b32.cont [10/16] 0.0, 128
        %941 = vxpose.xlu0.b32.cont [11/16] 0.0, 128
        %942 = vxpose.xlu0.b32.cont [12/16] 0.0, 128
        %943 = vxpose.xlu0.b32.cont [13/16] 0.0, 128
        %944 = vxpose.xlu0.b32.cont [14/16] 0.0, 128
        %945 = vxpose.xlu0.b32.cont [15/16] 0.0, 128
        %946 = vxpose.xlu0.b32.end [16/16] 0.0, 128
        %v947 = vpop.trf.xlu0
        %v948 = vpop.trf.xlu0
        %v949 = vpop.trf.xlu0
        %v950 = vpop.trf.xlu0
        %v951 = vpop.trf.xlu0
        %v952 = vpop.trf.xlu0
        %v953 = vpop.trf.xlu0
        %v954 = vpop.trf.xlu0
        %v955 = vpop.trf.xlu0
        %v956 = vpop.trf.xlu0
        %v957 = vpop.trf.xlu0
        %v958 = vpop.trf.xlu0
        %v959 = vpop.trf.xlu0
        %v960 = vpop.trf.xlu0
        %v961 = vpop.trf.xlu0
        %v962 = vpop.trf.xlu0
        %963 = vxpose.xlu0.b32.start [1/16] %v920, 128
        %964 = vxpose.xlu0.b32.cont [2/16] 0.0, 128
        %965 = vxpose.xlu0.b32.cont [3/16] 0.0, 128
        %966 = vxpose.xlu0.b32.cont [4/16] 0.0, 128
        %967 = vxpose.xlu0.b32.cont [5/16] 0.0, 128
        %968 = vxpose.xlu0.b32.cont [6/16] 0.0, 128
        %969 = vxpose.xlu0.b32.cont [7/16] 0.0, 128
        %970 = vxpose.xlu0.b32.cont [8/16] 0.0, 128
        %971 = vxpose.xlu0.b32.cont [9/16] 0.0, 128
        %972 = vxpose.xlu0.b32.cont [10/16] 0.0, 128
        %973 = vxpose.xlu0.b32.cont [11/16] 0.0, 128
        %974 = vxpose.xlu0.b32.cont [12/16] 0.0, 128
        %975 = vxpose.xlu0.b32.cont [13/16] 0.0, 128
        %976 = vxpose.xlu0.b32.cont [14/16] 0.0, 128
        %977 = vxpose.xlu0.b32.cont [15/16] 0.0, 128
        %978 = vxpose.xlu0.b32.end [16/16] 0.0, 128
        %v979 = vpop.trf.xlu0
        %v980 = vpop.trf.xlu0
        %v981 = vpop.trf.xlu0
        %v982 = vpop.trf.xlu0
        %v983 = vpop.trf.xlu0
        %v984 = vpop.trf.xlu0
        %v985 = vpop.trf.xlu0
        %v986 = vpop.trf.xlu0
        %v987 = vpop.trf.xlu0
        %v988 = vpop.trf.xlu0
        %v989 = vpop.trf.xlu0
        %v990 = vpop.trf.xlu0
        %v991 = vpop.trf.xlu0
        %v992 = vpop.trf.xlu0
        %v993 = vpop.trf.xlu0
        %v994 = vpop.trf.xlu0
        %995 = vxpose.xlu0.b32.start [1/16] %v921, 128
        %996 = vxpose.xlu0.b32.cont [2/16] 0.0, 128
        %997 = vxpose.xlu0.b32.cont [3/16] 0.0, 128
        %998 = vxpose.xlu0.b32.cont [4/16] 0.0, 128
        %999 = vxpose.xlu0.b32.cont [5/16] 0.0, 128
        %1000 = vxpose.xlu0.b32.cont [6/16] 0.0, 128
        %1001 = vxpose.xlu0.b32.cont [7/16] 0.0, 128
        %1002 = vxpose.xlu0.b32.cont [8/16] 0.0, 128
        %1003 = vxpose.xlu0.b32.cont [9/16] 0.0, 128
        %1004 = vxpose.xlu0.b32.cont [10/16] 0.0, 128
        %1005 = vxpose.xlu0.b32.cont [11/16] 0.0, 128
        %1006 = vxpose.xlu0.b32.cont [12/16] 0.0, 128
        %1007 = vxpose.xlu0.b32.cont [13/16] 0.0, 128
        %1008 = vxpose.xlu0.b32.cont [14/16] 0.0, 128
        %1009 = vxpose.xlu0.b32.cont [15/16] 0.0, 128
        %1010 = vxpose.xlu0.b32.end [16/16] 0.0, 128
        %v1011 = vpop.trf.xlu0
        %v1012 = vpop.trf.xlu0
        %v1013 = vpop.trf.xlu0
        %v1014 = vpop.trf.xlu0
        %v1015 = vpop.trf.xlu0
        %v1016 = vpop.trf.xlu0
        %v1017 = vpop.trf.xlu0
        %v1018 = vpop.trf.xlu0
        %v1019 = vpop.trf.xlu0
        %v1020 = vpop.trf.xlu0
        %v1021 = vpop.trf.xlu0
        %v1022 = vpop.trf.xlu0
        %v1023 = vpop.trf.xlu0
        %v1024 = vpop.trf.xlu0
        %v1025 = vpop.trf.xlu0
        %v1026 = vpop.trf.xlu0
        %1027 = vxpose.xlu0.b32.start [1/16] %v922, 128
        %1028 = vxpose.xlu0.b32.cont [2/16] 0.0, 128
        %1029 = vxpose.xlu0.b32.cont [3/16] 0.0, 128
        %1030 = vxpose.xlu0.b32.cont [4/16] 0.0, 128
        %1031 = vxpose.xlu0.b32.cont [5/16] 0.0, 128
        %1032 = vxpose.xlu0.b32.cont [6/16] 0.0, 128
        %1033 = vxpose.xlu0.b32.cont [7/16] 0.0, 128
        %1034 = vxpose.xlu0.b32.cont [8/16] 0.0, 128
        %1035 = vxpose.xlu0.b32.cont [9/16] 0.0, 128
        %1036 = vxpose.xlu0.b32.cont [10/16] 0.0, 128
        %1037 = vxpose.xlu0.b32.cont [11/16] 0.0, 128
        %1038 = vxpose.xlu0.b32.cont [12/16] 0.0, 128
        %1039 = vxpose.xlu0.b32.cont [13/16] 0.0, 128
        %1040 = vxpose.xlu0.b32.cont [14/16] 0.0, 128
        %1041 = vxpose.xlu0.b32.cont [15/16] 0.0, 128
        %1042 = vxpose.xlu0.b32.end [16/16] 0.0, 128
        %v1043 = vpop.trf.xlu0
        %v1044 = vpop.trf.xlu0
        %v1045 = vpop.trf.xlu0
        %v1046 = vpop.trf.xlu0
        %v1047 = vpop.trf.xlu0
        %v1048 = vpop.trf.xlu0
        %v1049 = vpop.trf.xlu0
        %v1050 = vpop.trf.xlu0
        %v1051 = vpop.trf.xlu0
        %v1052 = vpop.trf.xlu0
        %v1053 = vpop.trf.xlu0
        %v1054 = vpop.trf.xlu0
        %v1055 = vpop.trf.xlu0
        %v1056 = vpop.trf.xlu0
        %v1057 = vpop.trf.xlu0
        %v1058 = vpop.trf.xlu0
        %v1059 = vpack.c.bf16 %v947, %v947
        %v1060 = vpack.c.bf16 %v979, %v979
        %v1061 = vpack.c.bf16 %v1011, %v1011
        %v1062 = vpack.c.bf16 %v1043, %v1043
        %1063 = vxpose.xlu0.b32.start [1/16] %v923, 128
        %1064 = vxpose.xlu0.b32.cont [2/16] 0.0, 128
        %1065 = vxpose.xlu0.b32.cont [3/16] 0.0, 128
        %1066 = vxpose.xlu0.b32.cont [4/16] 0.0, 128
        %1067 = vxpose.xlu0.b32.cont [5/16] 0.0, 128
        %1068 = vxpose.xlu0.b32.cont [6/16] 0.0, 128
        %1069 = vxpose.xlu0.b32.cont [7/16] 0.0, 128
        %1070 = vxpose.xlu0.b32.cont [8/16] 0.0, 128
        %1071 = vxpose.xlu0.b32.cont [9/16] 0.0, 128
        %1072 = vxpose.xlu0.b32.cont [10/16] 0.0, 128
        %1073 = vxpose.xlu0.b32.cont [11/16] 0.0, 128
        %1074 = vxpose.xlu0.b32.cont [12/16] 0.0, 128
        %1075 = vxpose.xlu0.b32.cont [13/16] 0.0, 128
        %1076 = vxpose.xlu0.b32.cont [14/16] 0.0, 128
        %1077 = vxpose.xlu0.b32.cont [15/16] 0.0, 128
        %1078 = vxpose.xlu0.b32.end [16/16] 0.0, 128
        %v1079 = vpop.trf.xlu0
        %v1080 = vpop.trf.xlu0
        %v1081 = vpop.trf.xlu0
        %v1082 = vpop.trf.xlu0
        %v1083 = vpop.trf.xlu0
        %v1084 = vpop.trf.xlu0
        %v1085 = vpop.trf.xlu0
        %v1086 = vpop.trf.xlu0
        %v1087 = vpop.trf.xlu0
        %v1088 = vpop.trf.xlu0
        %v1089 = vpop.trf.xlu0
        %v1090 = vpop.trf.xlu0
        %v1091 = vpop.trf.xlu0
        %v1092 = vpop.trf.xlu0
        %v1093 = vpop.trf.xlu0
        %v1094 = vpop.trf.xlu0
        %1095 = vxpose.xlu0.b32.start [1/16] %v924, 128
        %1096 = vxpose.xlu0.b32.cont [2/16] 0.0, 128
        %1097 = vxpose.xlu0.b32.cont [3/16] 0.0, 128
        %1098 = vxpose.xlu0.b32.cont [4/16] 0.0, 128
        %1099 = vxpose.xlu0.b32.cont [5/16] 0.0, 128
        %1100 = vxpose.xlu0.b32.cont [6/16] 0.0, 128
        %1101 = vxpose.xlu0.b32.cont [7/16] 0.0, 128
        %1102 = vxpose.xlu0.b32.cont [8/16] 0.0, 128
        %1103 = vxpose.xlu0.b32.cont [9/16] 0.0, 128
        %1104 = vxpose.xlu0.b32.cont [10/16] 0.0, 128
        %1105 = vxpose.xlu0.b32.cont [11/16] 0.0, 128
        %1106 = vxpose.xlu0.b32.cont [12/16] 0.0, 128
        %1107 = vxpose.xlu0.b32.cont [13/16] 0.0, 128
        %1108 = vxpose.xlu0.b32.cont [14/16] 0.0, 128
        %1109 = vxpose.xlu0.b32.cont [15/16] 0.0, 128
        %1110 = vxpose.xlu0.b32.end [16/16] 0.0, 128
        %v1111 = vpop.trf.xlu0
        %v1112 = vpop.trf.xlu0
        %v1113 = vpop.trf.xlu0
        %v1114 = vpop.trf.xlu0
        %v1115 = vpop.trf.xlu0
        %v1116 = vpop.trf.xlu0
        %v1117 = vpop.trf.xlu0
        %v1118 = vpop.trf.xlu0
        %v1119 = vpop.trf.xlu0
        %v1120 = vpop.trf.xlu0
        %v1121 = vpop.trf.xlu0
        %v1122 = vpop.trf.xlu0
        %v1123 = vpop.trf.xlu0
        %v1124 = vpop.trf.xlu0
        %v1125 = vpop.trf.xlu0
        %v1126 = vpop.trf.xlu0
        %1127 = vxpose.xlu0.b32.start [1/16] %v925, 128
        %1128 = vxpose.xlu0.b32.cont [2/16] 0.0, 128
        %1129 = vxpose.xlu0.b32.cont [3/16] 0.0, 128
        %1130 = vxpose.xlu0.b32.cont [4/16] 0.0, 128
        %1131 = vxpose.xlu0.b32.cont [5/16] 0.0, 128
        %1132 = vxpose.xlu0.b32.cont [6/16] 0.0, 128
        %1133 = vxpose.xlu0.b32.cont [7/16] 0.0, 128
        %1134 = vxpose.xlu0.b32.cont [8/16] 0.0, 128
        %1135 = vxpose.xlu0.b32.cont [9/16] 0.0, 128
        %1136 = vxpose.xlu0.b32.cont [10/16] 0.0, 128
        %1137 = vxpose.xlu0.b32.cont [11/16] 0.0, 128
        %1138 = vxpose.xlu0.b32.cont [12/16] 0.0, 128
        %1139 = vxpose.xlu0.b32.cont [13/16] 0.0, 128
        %1140 = vxpose.xlu0.b32.cont [14/16] 0.0, 128
        %1141 = vxpose.xlu0.b32.cont [15/16] 0.0, 128
        %1142 = vxpose.xlu0.b32.end [16/16] 0.0, 128
        %v1143 = vpop.trf.xlu0
        %v1144 = vpop.trf.xlu0
        %v1145 = vpop.trf.xlu0
        %v1146 = vpop.trf.xlu0
        %v1147 = vpop.trf.xlu0
        %v1148 = vpop.trf.xlu0
        %v1149 = vpop.trf.xlu0
        %v1150 = vpop.trf.xlu0
        %v1151 = vpop.trf.xlu0
        %v1152 = vpop.trf.xlu0
        %v1153 = vpop.trf.xlu0
        %v1154 = vpop.trf.xlu0
        %v1155 = vpop.trf.xlu0
        %v1156 = vpop.trf.xlu0
        %v1157 = vpop.trf.xlu0
        %v1158 = vpop.trf.xlu0
        %1159 = vxpose.xlu0.b32.start [1/16] %v926, 128
        %1160 = vxpose.xlu0.b32.cont [2/16] 0.0, 128
        %1161 = vxpose.xlu0.b32.cont [3/16] 0.0, 128
        %1162 = vxpose.xlu0.b32.cont [4/16] 0.0, 128
        %1163 = vxpose.xlu0.b32.cont [5/16] 0.0, 128
        %1164 = vxpose.xlu0.b32.cont [6/16] 0.0, 128
        %1165 = vxpose.xlu0.b32.cont [7/16] 0.0, 128
        %1166 = vxpose.xlu0.b32.cont [8/16] 0.0, 128
        %1167 = vxpose.xlu0.b32.cont [9/16] 0.0, 128
        %1168 = vxpose.xlu0.b32.cont [10/16] 0.0, 128
        %1169 = vxpose.xlu0.b32.cont [11/16] 0.0, 128
        %1170 = vxpose.xlu0.b32.cont [12/16] 0.0, 128
        %1171 = vxpose.xlu0.b32.cont [13/16] 0.0, 128
        %1172 = vxpose.xlu0.b32.cont [14/16] 0.0, 128
        %1173 = vxpose.xlu0.b32.cont [15/16] 0.0, 128
        %1174 = vxpose.xlu0.b32.end [16/16] 0.0, 128
        %v1175 = vpop.trf.xlu0
        %v1176 = vpop.trf.xlu0
        %v1177 = vpop.trf.xlu0
        %v1178 = vpop.trf.xlu0
        %v1179 = vpop.trf.xlu0
        %v1180 = vpop.trf.xlu0
        %v1181 = vpop.trf.xlu0
        %v1182 = vpop.trf.xlu0
        %v1183 = vpop.trf.xlu0
        %v1184 = vpop.trf.xlu0
        %v1185 = vpop.trf.xlu0
        %v1186 = vpop.trf.xlu0
        %v1187 = vpop.trf.xlu0
        %v1188 = vpop.trf.xlu0
        %v1189 = vpop.trf.xlu0
        %v1190 = vpop.trf.xlu0
        %v1191 = vpack.c.bf16 %v1079, %v1079
        %v1192 = vpack.c.bf16 %v1111, %v1111
        %v1193 = vpack.c.bf16 %v1143, %v1143
        %v1194 = vpack.c.bf16 %v1175, %v1175
        %1195 = vxpose.xlu0.b32.start [1/16] %v927, 128
        %1196 = vxpose.xlu0.b32.cont [2/16] 0.0, 128
        %1197 = vxpose.xlu0.b32.cont [3/16] 0.0, 128
        %1198 = vxpose.xlu0.b32.cont [4/16] 0.0, 128
        %1199 = vxpose.xlu0.b32.cont [5/16] 0.0, 128
        %1200 = vxpose.xlu0.b32.cont [6/16] 0.0, 128
        %1201 = vxpose.xlu0.b32.cont [7/16] 0.0, 128
        %1202 = vxpose.xlu0.b32.cont [8/16] 0.0, 128
        %1203 = vxpose.xlu0.b32.cont [9/16] 0.0, 128
        %1204 = vxpose.xlu0.b32.cont [10/16] 0.0, 128
        %1205 = vxpose.xlu0.b32.cont [11/16] 0.0, 128
        %1206 = vxpose.xlu0.b32.cont [12/16] 0.0, 128
        %1207 = vxpose.xlu0.b32.cont [13/16] 0.0, 128
        %1208 = vxpose.xlu0.b32.cont [14/16] 0.0, 128
        %1209 = vxpose.xlu0.b32.cont [15/16] 0.0, 128
        %1210 = vxpose.xlu0.b32.end [16/16] 0.0, 128
        %v1211 = vpop.trf.xlu0
        %v1212 = vpop.trf.xlu0
        %v1213 = vpop.trf.xlu0
        %v1214 = vpop.trf.xlu0
        %v1215 = vpop.trf.xlu0
        %v1216 = vpop.trf.xlu0
        %v1217 = vpop.trf.xlu0
        %v1218 = vpop.trf.xlu0
        %v1219 = vpop.trf.xlu0
        %v1220 = vpop.trf.xlu0
        %v1221 = vpop.trf.xlu0
        %v1222 = vpop.trf.xlu0
        %v1223 = vpop.trf.xlu0
        %v1224 = vpop.trf.xlu0
        %v1225 = vpop.trf.xlu0
        %v1226 = vpop.trf.xlu0
        %1227 = vxpose.xlu0.b32.start [1/16] %v928, 128
        %1228 = vxpose.xlu0.b32.cont [2/16] 0.0, 128
        %1229 = vxpose.xlu0.b32.cont [3/16] 0.0, 128
        %1230 = vxpose.xlu0.b32.cont [4/16] 0.0, 128
        %1231 = vxpose.xlu0.b32.cont [5/16] 0.0, 128
        %1232 = vxpose.xlu0.b32.cont [6/16] 0.0, 128
        %1233 = vxpose.xlu0.b32.cont [7/16] 0.0, 128
        %1234 = vxpose.xlu0.b32.cont [8/16] 0.0, 128
        %1235 = vxpose.xlu0.b32.cont [9/16] 0.0, 128
        %1236 = vxpose.xlu0.b32.cont [10/16] 0.0, 128
        %1237 = vxpose.xlu0.b32.cont [11/16] 0.0, 128
        %1238 = vxpose.xlu0.b32.cont [12/16] 0.0, 128
        %1239 = vxpose.xlu0.b32.cont [13/16] 0.0, 128
        %1240 = vxpose.xlu0.b32.cont [14/16] 0.0, 128
        %1241 = vxpose.xlu0.b32.cont [15/16] 0.0, 128
        %1242 = vxpose.xlu0.b32.end [16/16] 0.0, 128
        %v1243 = vpop.trf.xlu0
        %v1244 = vpop.trf.xlu0
        %v1245 = vpop.trf.xlu0
        %v1246 = vpop.trf.xlu0
        %v1247 = vpop.trf.xlu0
        %v1248 = vpop.trf.xlu0
        %v1249 = vpop.trf.xlu0
        %v1250 = vpop.trf.xlu0
        %v1251 = vpop.trf.xlu0
        %v1252 = vpop.trf.xlu0
        %v1253 = vpop.trf.xlu0
        %v1254 = vpop.trf.xlu0
        %v1255 = vpop.trf.xlu0
        %v1256 = vpop.trf.xlu0
        %v1257 = vpop.trf.xlu0
        %v1258 = vpop.trf.xlu0
        %1259 = vxpose.xlu0.b32.start [1/16] %v929, 128
        %1260 = vxpose.xlu0.b32.cont [2/16] 0.0, 128
        %1261 = vxpose.xlu0.b32.cont [3/16] 0.0, 128
        %1262 = vxpose.xlu0.b32.cont [4/16] 0.0, 128
        %1263 = vxpose.xlu0.b32.cont [5/16] 0.0, 128
        %1264 = vxpose.xlu0.b32.cont [6/16] 0.0, 128
        %1265 = vxpose.xlu0.b32.cont [7/16] 0.0, 128
        %1266 = vxpose.xlu0.b32.cont [8/16] 0.0, 128
        %1267 = vxpose.xlu0.b32.cont [9/16] 0.0, 128
        %1268 = vxpose.xlu0.b32.cont [10/16] 0.0, 128
        %1269 = vxpose.xlu0.b32.cont [11/16] 0.0, 128
        %1270 = vxpose.xlu0.b32.cont [12/16] 0.0, 128
        %1271 = vxpose.xlu0.b32.cont [13/16] 0.0, 128
        %1272 = vxpose.xlu0.b32.cont [14/16] 0.0, 128
        %1273 = vxpose.xlu0.b32.cont [15/16] 0.0, 128
        %1274 = vxpose.xlu0.b32.end [16/16] 0.0, 128
        %v1275 = vpop.trf.xlu0
        %v1276 = vpop.trf.xlu0
        %v1277 = vpop.trf.xlu0
        %v1278 = vpop.trf.xlu0
        %v1279 = vpop.trf.xlu0
        %v1280 = vpop.trf.xlu0
        %v1281 = vpop.trf.xlu0
        %v1282 = vpop.trf.xlu0
        %v1283 = vpop.trf.xlu0
        %v1284 = vpop.trf.xlu0
        %v1285 = vpop.trf.xlu0
        %v1286 = vpop.trf.xlu0
        %v1287 = vpop.trf.xlu0
        %v1288 = vpop.trf.xlu0
        %v1289 = vpop.trf.xlu0
        %v1290 = vpop.trf.xlu0
        %1291 = vxpose.xlu0.b32.start [1/16] %v930, 128
        %1292 = vxpose.xlu0.b32.cont [2/16] 0.0, 128
        %1293 = vxpose.xlu0.b32.cont [3/16] 0.0, 128
        %1294 = vxpose.xlu0.b32.cont [4/16] 0.0, 128
        %1295 = vxpose.xlu0.b32.cont [5/16] 0.0, 128
        %1296 = vxpose.xlu0.b32.cont [6/16] 0.0, 128
        %1297 = vxpose.xlu0.b32.cont [7/16] 0.0, 128
        %1298 = vxpose.xlu0.b32.cont [8/16] 0.0, 128
        %1299 = vxpose.xlu0.b32.cont [9/16] 0.0, 128
        %1300 = vxpose.xlu0.b32.cont [10/16] 0.0, 128
        %1301 = vxpose.xlu0.b32.cont [11/16] 0.0, 128
        %1302 = vxpose.xlu0.b32.cont [12/16] 0.0, 128
        %1303 = vxpose.xlu0.b32.cont [13/16] 0.0, 128
        %1304 = vxpose.xlu0.b32.cont [14/16] 0.0, 128
        %1305 = vxpose.xlu0.b32.cont [15/16] 0.0, 128
        %1306 = vxpose.xlu0.b32.end [16/16] 0.0, 128
        %v1307 = vpop.trf.xlu0
        %v1308 = vpop.trf.xlu0
        %v1309 = vpop.trf.xlu0
        %v1310 = vpop.trf.xlu0
        %v1311 = vpop.trf.xlu0
        %v1312 = vpop.trf.xlu0
        %v1313 = vpop.trf.xlu0
        %v1314 = vpop.trf.xlu0
        %v1315 = vpop.trf.xlu0
        %v1316 = vpop.trf.xlu0
        %v1317 = vpop.trf.xlu0
        %v1318 = vpop.trf.xlu0
        %v1319 = vpop.trf.xlu0
        %v1320 = vpop.trf.xlu0
        %v1321 = vpop.trf.xlu0
        %v1322 = vpop.trf.xlu0
        %v1323 = vpack.c.bf16 %v1211, %v1211
        %v1324 = vpack.c.bf16 %v1243, %v1243
        %v1325 = vpack.c.bf16 %v1275, %v1275
        %v1326 = vpack.c.bf16 %v1307, %v1307
        %vm1327 = vcmask 64512
        %v1329 = vsel %vm1327, %v1059, 0
        %v1332 = vsel %vm1327, %v1191, 0
        %1334 = vmatprep.subr.bf16.mxu0 0
        %1335 = vmatpush1.bf16.xpose.msra.mxu0 0
        %1336 = vmatprep.subr.bf16.mxu0 0
        %1337 = vmatpush1.bf16.xpose.msra.mxu0 0
        %1338 = vmatprep.subr.bf16.mxu0 0
        %1339 = vmatpush1.bf16.xpose.msra.mxu0 0
        %1340 = vmatprep.subr.bf16.mxu0 0
        %1341 = vmatpush1.bf16.xpose.msra.mxu0 0
        %1342 = vmatprep.subr.bf16.mxu0 0
        %1343 = vmatpush1.bf16.xpose.msra.mxu0 0
        %1344 = vmatprep.subr.bf16.mxu0 0
        %1345 = vmatpush1.bf16.xpose.msra.mxu0 0
        %1346 = vmatprep.subr.bf16.mxu0 0
        %1347 = vmatpush1.bf16.xpose.msra.mxu0 0
        %1348 = vmatprep.subr.bf16.mxu0 0
        %1349 = vmatpush1.bf16.xpose.msra.mxu0 %v1332
        %1350 = vmatprep.subr.bf16.mxu0 0
        %1351 = vmatpush2.bf16.xpose.msra.mxu0 0
        %1352 = vmatprep.subr.bf16.mxu0 0
        %1353 = vmatpush2.bf16.xpose.msra.mxu0 0
        %1354 = vmatprep.subr.bf16.mxu0 0
        %1355 = vmatpush2.bf16.xpose.msra.mxu0 0
        %1356 = vmatprep.subr.bf16.mxu0 0
        %1357 = vmatpush2.bf16.xpose.msra.mxu0 0
        %1358 = vmatprep.subr.bf16.mxu0 0
        %1359 = vmatpush2.bf16.xpose.msra.mxu0 0
        %1360 = vmatprep.subr.bf16.mxu0 0
        %1361 = vmatpush2.bf16.xpose.msra.mxu0 0
        %1362 = vmatprep.subr.bf16.mxu0 0
        %1363 = vmatpush2.bf16.xpose.msra.mxu0 0
        %1364 = vmatprep.subr.bf16.mxu0 0
        %1365 = vmatpush2.bf16.xpose.msra.mxu0 0
        %1366 = vmatprep.mubr.bf16.mxu0 0
        %1367 = vmatmul.mubr.bf16.gmra.mxu0 %v1329
        %v1368 = vpop.f32.mrf.mxu0
        %v1369 = vadd.f32 0.0, %v1368
        %v1370 = vpop.f32.mrf.mxu0
        %v1371 = vpop.f32.mrf.mxu0
        %v1372 = vpop.f32.mrf.mxu0
        %1373 = vdwg.mxu0
        %v1375 = vsel %vm1327, %v1060, 0
        %v1378 = vsel %vm1327, %v1192, 0
        %1380 = vmatprep.subr.bf16.mxu0 0
        %1381 = vmatpush1.bf16.xpose.msra.mxu0 0
        %1382 = vmatprep.subr.bf16.mxu0 0
        %1383 = vmatpush1.bf16.xpose.msra.mxu0 0
        %1384 = vmatprep.subr.bf16.mxu0 0
        %1385 = vmatpush1.bf16.xpose.msra.mxu0 0
        %1386 = vmatprep.subr.bf16.mxu0 0
        %1387 = vmatpush1.bf16.xpose.msra.mxu0 0
        %1388 = vmatprep.subr.bf16.mxu0 0
        %1389 = vmatpush1.bf16.xpose.msra.mxu0 0
        %1390 = vmatprep.subr.bf16.mxu0 0
        %1391 = vmatpush1.bf16.xpose.msra.mxu0 0
        %1392 = vmatprep.subr.bf16.mxu0 0
        %1393 = vmatpush1.bf16.xpose.msra.mxu0 0
        %1394 = vmatprep.subr.bf16.mxu0 0
        %1395 = vmatpush1.bf16.xpose.msra.mxu0 %v1378
        %1396 = vmatprep.subr.bf16.mxu0 0
        %1397 = vmatpush2.bf16.xpose.msra.mxu0 0
        %1398 = vmatprep.subr.bf16.mxu0 0
        %1399 = vmatpush2.bf16.xpose.msra.mxu0 0
        %1400 = vmatprep.subr.bf16.mxu0 0
        %1401 = vmatpush2.bf16.xpose.msra.mxu0 0
        %1402 = vmatprep.subr.bf16.mxu0 0
        %1403 = vmatpush2.bf16.xpose.msra.mxu0 0
        %1404 = vmatprep.subr.bf16.mxu0 0
        %1405 = vmatpush2.bf16.xpose.msra.mxu0 0
        %1406 = vmatprep.subr.bf16.mxu0 0
        %1407 = vmatpush2.bf16.xpose.msra.mxu0 0
        %1408 = vmatprep.subr.bf16.mxu0 0
        %1409 = vmatpush2.bf16.xpose.msra.mxu0 0
        %1410 = vmatprep.subr.bf16.mxu0 0
        %1411 = vmatpush2.bf16.xpose.msra.mxu0 0
        %1412 = vmatprep.mubr.bf16.mxu0 0
        %1413 = vmatmul.mubr.bf16.gmra.mxu0 %v1375
        %v1414 = vpop.f32.mrf.mxu0
        %v1415 = vadd.f32 0.0, %v1414
        %v1416 = vpop.f32.mrf.mxu0
        %v1417 = vpop.f32.mrf.mxu0
        %v1418 = vpop.f32.mrf.mxu0
        %1419 = vdwg.mxu0
        %v1421 = vsel %vm1327, %v1061, 0
        %v1424 = vsel %vm1327, %v1193, 0
        %1426 = vmatprep.subr.bf16.mxu0 0
        %1427 = vmatpush1.bf16.xpose.msra.mxu0 0
        %1428 = vmatprep.subr.bf16.mxu0 0
        %1429 = vmatpush1.bf16.xpose.msra.mxu0 0
        %1430 = vmatprep.subr.bf16.mxu0 0
        %1431 = vmatpush1.bf16.xpose.msra.mxu0 0
        %1432 = vmatprep.subr.bf16.mxu0 0
        %1433 = vmatpush1.bf16.xpose.msra.mxu0 0
        %1434 = vmatprep.subr.bf16.mxu0 0
        %1435 = vmatpush1.bf16.xpose.msra.mxu0 0
        %1436 = vmatprep.subr.bf16.mxu0 0
        %1437 = vmatpush1.bf16.xpose.msra.mxu0 0
        %1438 = vmatprep.subr.bf16.mxu0 0
        %1439 = vmatpush1.bf16.xpose.msra.mxu0 0
        %1440 = vmatprep.subr.bf16.mxu0 0
        %1441 = vmatpush1.bf16.xpose.msra.mxu0 %v1424
        %1442 = vmatprep.subr.bf16.mxu0 0
        %1443 = vmatpush2.bf16.xpose.msra.mxu0 0
        %1444 = vmatprep.subr.bf16.mxu0 0
        %1445 = vmatpush2.bf16.xpose.msra.mxu0 0
        %1446 = vmatprep.subr.bf16.mxu0 0
        %1447 = vmatpush2.bf16.xpose.msra.mxu0 0
        %1448 = vmatprep.subr.bf16.mxu0 0
        %1449 = vmatpush2.bf16.xpose.msra.mxu0 0
        %1450 = vmatprep.subr.bf16.mxu0 0
        %1451 = vmatpush2.bf16.xpose.msra.mxu0 0
        %1452 = vmatprep.subr.bf16.mxu0 0
        %1453 = vmatpush2.bf16.xpose.msra.mxu0 0
        %1454 = vmatprep.subr.bf16.mxu0 0
        %1455 = vmatpush2.bf16.xpose.msra.mxu0 0
        %1456 = vmatprep.subr.bf16.mxu0 0
        %1457 = vmatpush2.bf16.xpose.msra.mxu0 0
        %1458 = vmatprep.mubr.bf16.mxu0 0
        %1459 = vmatmul.mubr.bf16.gmra.mxu0 %v1421
        %v1460 = vpop.f32.mrf.mxu0
        %v1461 = vadd.f32 0.0, %v1460
        %v1462 = vpop.f32.mrf.mxu0
        %v1463 = vpop.f32.mrf.mxu0
        %v1464 = vpop.f32.mrf.mxu0
        %1465 = vdwg.mxu0
        %v1467 = vsel %vm1327, %v1062, 0
        %v1470 = vsel %vm1327, %v1194, 0
        %1472 = vmatprep.subr.bf16.mxu0 0
        %1473 = vmatpush1.bf16.xpose.msra.mxu0 0
        %1474 = vmatprep.subr.bf16.mxu0 0
        %1475 = vmatpush1.bf16.xpose.msra.mxu0 0
        %1476 = vmatprep.subr.bf16.mxu0 0
        %1477 = vmatpush1.bf16.xpose.msra.mxu0 0
        %1478 = vmatprep.subr.bf16.mxu0 0
        %1479 = vmatpush1.bf16.xpose.msra.mxu0 0
        %1480 = vmatprep.subr.bf16.mxu0 0
        %1481 = vmatpush1.bf16.xpose.msra.mxu0 0
        %1482 = vmatprep.subr.bf16.mxu0 0
        %1483 = vmatpush1.bf16.xpose.msra.mxu0 0
        %1484 = vmatprep.subr.bf16.mxu0 0
        %1485 = vmatpush1.bf16.xpose.msra.mxu0 0
        %1486 = vmatprep.subr.bf16.mxu0 0
        %1487 = vmatpush1.bf16.xpose.msra.mxu0 %v1470
        %1488 = vmatprep.subr.bf16.mxu0 0
        %1489 = vmatpush2.bf16.xpose.msra.mxu0 0
        %1490 = vmatprep.subr.bf16.mxu0 0
        %1491 = vmatpush2.bf16.xpose.msra.mxu0 0
        %1492 = vmatprep.subr.bf16.mxu0 0
        %1493 = vmatpush2.bf16.xpose.msra.mxu0 0
        %1494 = vmatprep.subr.bf16.mxu0 0
        %1495 = vmatpush2.bf16.xpose.msra.mxu0 0
        %1496 = vmatprep.subr.bf16.mxu0 0
        %1497 = vmatpush2.bf16.xpose.msra.mxu0 0
        %1498 = vmatprep.subr.bf16.mxu0 0
        %1499 = vmatpush2.bf16.xpose.msra.mxu0 0
        %1500 = vmatprep.subr.bf16.mxu0 0
        %1501 = vmatpush2.bf16.xpose.msra.mxu0 0
        %1502 = vmatprep.subr.bf16.mxu0 0
        %1503 = vmatpush2.bf16.xpose.msra.mxu0 0
        %1504 = vmatprep.mubr.bf16.mxu0 0
        %1505 = vmatmul.mubr.bf16.gmra.mxu0 %v1467
        %v1506 = vpop.f32.mrf.mxu0
        %v1507 = vadd.f32 0.0, %v1506
        %v1508 = vpop.f32.mrf.mxu0
        %v1509 = vpop.f32.mrf.mxu0
        %v1510 = vpop.f32.mrf.mxu0
        %1511 = vdwg.mxu0
        %v1512 = vmul.f32 %v1369, 0.35355338
        %v1513 = vmul.f32 %v1415, 0.35355338
        %v1514 = vmul.f32 %v1461, 0.35355338
        %v1515 = vmul.f32 %v1507, 0.35355338
        %v1516 = vsel %vm1327, %v1512, -inf
        %1517 = vmax.xlane.f32.xlu0 %v1516
        %v1518 = vpop.xlane.xlu0 %1517
        %v1519 = vsel %vm1327, %v1513, -inf
        %1520 = vmax.xlane.f32.xlu0 %v1519
        %v1521 = vpop.xlane.xlu0 %1520
        %v1522 = vsel %vm1327, %v1514, -inf
        %1523 = vmax.xlane.f32.xlu0 %v1522
        %v1524 = vpop.xlane.xlu0 %1523
        %v1525 = vsel %vm1327, %v1515, -inf
        %1526 = vmax.xlane.f32.xlu0 %v1525
        %v1527 = vpop.xlane.xlu0 %1526
        %v1528 = vsub.f32 %v1512, %v1518
        %v1529 = vsub.f32 %v1513, %v1521
        %v1530 = vsub.f32 %v1514, %v1524
        %v1531 = vsub.f32 %v1515, %v1527
        %v1532 = vmul.f32 %v1528, 1.442695
        %v1533 = vpow.pop %v1532
        %v1534 = vmul.f32 %v1529, 1.442695
        %v1535 = vpow.pop %v1534
        %v1536 = vmul.f32 %v1530, 1.442695
        %v1537 = vpow.pop %v1536
        %v1538 = vmul.f32 %v1531, 1.442695
        %v1539 = vpow.pop %v1538
        %v1540 = vsel %vm1327, %v1533, 0.0
        %1541 = vadd.xlane.f32.xlu0 %v1540
        %v1542 = vpop.xlane.xlu0 %1541
        %v1543 = vsel %vm1327, %v1535, 0.0
        %1544 = vadd.xlane.f32.xlu0 %v1543
        %v1545 = vpop.xlane.xlu0 %1544
        %v1546 = vsel %vm1327, %v1537, 0.0
        %1547 = vadd.xlane.f32.xlu0 %v1546
        %v1548 = vpop.xlane.xlu0 %1547
        %v1549 = vsel %vm1327, %v1539, 0.0
        %1550 = vadd.xlane.f32.xlu0 %v1549
        %v1551 = vpop.xlane.xlu0 %1550
        %v1552 = vrcp.pop %v1542
        %v1553 = vrcp.pop %v1545
        %v1554 = vrcp.pop %v1548
        %v1555 = vrcp.pop %v1551
        %v1556 = vmul.f32 %v1533, %v1552
        %v1557 = vmul.f32 %v1535, %v1553
        %v1558 = vmul.f32 %v1537, %v1554
        %v1559 = vmul.f32 %v1539, %v1555
        %v1560 = vpack.c.bf16 %v1556, %v1556
        %v1561 = vpack.c.bf16 %v1557, %v1557
        %v1562 = vpack.c.bf16 %v1558, %v1558
        %v1563 = vpack.c.bf16 %v1559, %v1559
        %v1565 = vsel %vm1327, %v1560, 0
        %vm1567 = vcmask 1043456
        %v1569 = vsel %vm1567, %v1323, 0
        %1571 = vmatprep.subr.bf16.mxu0 0
        %1572 = vmatpush1.bf16.msra.mxu0 0
        %1573 = vmatprep.subr.bf16.mxu0 0
        %1574 = vmatpush1.bf16.msra.mxu0 0
        %1575 = vmatprep.subr.bf16.mxu0 0
        %1576 = vmatpush1.bf16.msra.mxu0 0
        %1577 = vmatprep.subr.bf16.mxu0 0
        %1578 = vmatpush1.bf16.msra.mxu0 0
        %1579 = vmatprep.subr.bf16.mxu0 0
        %1580 = vmatpush1.bf16.msra.mxu0 0
        %1581 = vmatprep.subr.bf16.mxu0 0
        %1582 = vmatpush1.bf16.msra.mxu0 0
        %1583 = vmatprep.subr.bf16.mxu0 0
        %1584 = vmatpush1.bf16.msra.mxu0 0
        %1585 = vmatprep.subr.bf16.mxu0 0
        %1586 = vmatpush1.bf16.msra.mxu0 %v1569
        %1587 = vmatprep.subr.bf16.mxu0 0
        %1588 = vmatpush2.bf16.msra.mxu0 0
        %1589 = vmatprep.subr.bf16.mxu0 0
        %1590 = vmatpush2.bf16.msra.mxu0 0
        %1591 = vmatprep.subr.bf16.mxu0 0
        %1592 = vmatpush2.bf16.msra.mxu0 0
        %1593 = vmatprep.subr.bf16.mxu0 0
        %1594 = vmatpush2.bf16.msra.mxu0 0
        %1595 = vmatprep.subr.bf16.mxu0 0
        %1596 = vmatpush2.bf16.msra.mxu0 0
        %1597 = vmatprep.subr.bf16.mxu0 0
        %1598 = vmatpush2.bf16.msra.mxu0 0
        %1599 = vmatprep.subr.bf16.mxu0 0
        %1600 = vmatpush2.bf16.msra.mxu0 0
        %1601 = vmatprep.subr.bf16.mxu0 0
        %1602 = vmatpush2.bf16.msra.mxu0 0
        %1603 = vmatprep.mubr.bf16.mxu0 0
        %1604 = vmatmul.mubr.bf16.gmra.mxu0 %v1565
        %v1605 = vpop.f32.mrf.mxu0
        %v1606 = vadd.f32 0.0, %v1605
        %v1607 = vpop.f32.mrf.mxu0
        %v1608 = vpop.f32.mrf.mxu0
        %v1609 = vpop.f32.mrf.mxu0
        %1610 = vdwg.mxu0
        %v1612 = vsel %vm1327, %v1561, 0
        %v1615 = vsel %vm1567, %v1324, 0
        %1617 = vmatprep.subr.bf16.mxu0 0
        %1618 = vmatpush1.bf16.msra.mxu0 0
        %1619 = vmatprep.subr.bf16.mxu0 0
        %1620 = vmatpush1.bf16.msra.mxu0 0
        %1621 = vmatprep.subr.bf16.mxu0 0
        %1622 = vmatpush1.bf16.msra.mxu0 0
        %1623 = vmatprep.subr.bf16.mxu0 0
        %1624 = vmatpush1.bf16.msra.mxu0 0
        %1625 = vmatprep.subr.bf16.mxu0 0
        %1626 = vmatpush1.bf16.msra.mxu0 0
        %1627 = vmatprep.subr.bf16.mxu0 0
        %1628 = vmatpush1.bf16.msra.mxu0 0
        %1629 = vmatprep.subr.bf16.mxu0 0
        %1630 = vmatpush1.bf16.msra.mxu0 0
        %1631 = vmatprep.subr.bf16.mxu0 0
        %1632 = vmatpush1.bf16.msra.mxu0 %v1615
        %1633 = vmatprep.subr.bf16.mxu0 0
        %1634 = vmatpush2.bf16.msra.mxu0 0
        %1635 = vmatprep.subr.bf16.mxu0 0
        %1636 = vmatpush2.bf16.msra.mxu0 0
        %1637 = vmatprep.subr.bf16.mxu0 0
        %1638 = vmatpush2.bf16.msra.mxu0 0
        %1639 = vmatprep.subr.bf16.mxu0 0
        %1640 = vmatpush2.bf16.msra.mxu0 0
        %1641 = vmatprep.subr.bf16.mxu0 0
        %1642 = vmatpush2.bf16.msra.mxu0 0
        %1643 = vmatprep.subr.bf16.mxu0 0
        %1644 = vmatpush2.bf16.msra.mxu0 0
        %1645 = vmatprep.subr.bf16.mxu0 0
        %1646 = vmatpush2.bf16.msra.mxu0 0
        %1647 = vmatprep.subr.bf16.mxu0 0
        %1648 = vmatpush2.bf16.msra.mxu0 0
        %1649 = vmatprep.mubr.bf16.mxu0 0
        %1650 = vmatmul.mubr.bf16.gmra.mxu0 %v1612
        %v1651 = vpop.f32.mrf.mxu0
        %v1652 = vadd.f32 0.0, %v1651
        %v1653 = vpop.f32.mrf.mxu0
        %v1654 = vpop.f32.mrf.mxu0
        %v1655 = vpop.f32.mrf.mxu0
        %1656 = vdwg.mxu0
        %v1658 = vsel %vm1327, %v1562, 0
        %v1661 = vsel %vm1567, %v1325, 0
        %1663 = vmatprep.subr.bf16.mxu0 0
        %1664 = vmatpush1.bf16.msra.mxu0 0
        %1665 = vmatprep.subr.bf16.mxu0 0
        %1666 = vmatpush1.bf16.msra.mxu0 0
        %1667 = vmatprep.subr.bf16.mxu0 0
        %1668 = vmatpush1.bf16.msra.mxu0 0
        %1669 = vmatprep.subr.bf16.mxu0 0
        %1670 = vmatpush1.bf16.msra.mxu0 0
        %1671 = vmatprep.subr.bf16.mxu0 0
        %1672 = vmatpush1.bf16.msra.mxu0 0
        %1673 = vmatprep.subr.bf16.mxu0 0
        %1674 = vmatpush1.bf16.msra.mxu0 0
        %1675 = vmatprep.subr.bf16.mxu0 0
        %1676 = vmatpush1.bf16.msra.mxu0 0
        %1677 = vmatprep.subr.bf16.mxu0 0
        %1678 = vmatpush1.bf16.msra.mxu0 %v1661
        %1679 = vmatprep.subr.bf16.mxu0 0
        %1680 = vmatpush2.bf16.msra.mxu0 0
        %1681 = vmatprep.subr.bf16.mxu0 0
        %1682 = vmatpush2.bf16.msra.mxu0 0
        %1683 = vmatprep.subr.bf16.mxu0 0
        %1684 = vmatpush2.bf16.msra.mxu0 0
        %1685 = vmatprep.subr.bf16.mxu0 0
        %1686 = vmatpush2.bf16.msra.mxu0 0
        %1687 = vmatprep.subr.bf16.mxu0 0
        %1688 = vmatpush2.bf16.msra.mxu0 0
        %1689 = vmatprep.subr.bf16.mxu0 0
        %1690 = vmatpush2.bf16.msra.mxu0 0
        %1691 = vmatprep.subr.bf16.mxu0 0
        %1692 = vmatpush2.bf16.msra.mxu0 0
        %1693 = vmatprep.subr.bf16.mxu0 0
        %1694 = vmatpush2.bf16.msra.mxu0 0
        %1695 = vmatprep.mubr.bf16.mxu0 0
        %1696 = vmatmul.mubr.bf16.gmra.mxu0 %v1658
        %v1697 = vpop.f32.mrf.mxu0
        %v1698 = vadd.f32 0.0, %v1697
        %v1699 = vpop.f32.mrf.mxu0
        %v1700 = vpop.f32.mrf.mxu0
        %v1701 = vpop.f32.mrf.mxu0
        %1702 = vdwg.mxu0
        %v1704 = vsel %vm1327, %v1563, 0
        %v1707 = vsel %vm1567, %v1326, 0
        %1709 = vmatprep.subr.bf16.mxu0 0
        %1710 = vmatpush1.bf16.msra.mxu0 0
        %1711 = vmatprep.subr.bf16.mxu0 0
        %1712 = vmatpush1.bf16.msra.mxu0 0
        %1713 = vmatprep.subr.bf16.mxu0 0
        %1714 = vmatpush1.bf16.msra.mxu0 0
        %1715 = vmatprep.subr.bf16.mxu0 0
        %1716 = vmatpush1.bf16.msra.mxu0 0
        %1717 = vmatprep.subr.bf16.mxu0 0
        %1718 = vmatpush1.bf16.msra.mxu0 0
        %1719 = vmatprep.subr.bf16.mxu0 0
        %1720 = vmatpush1.bf16.msra.mxu0 0
        %1721 = vmatprep.subr.bf16.mxu0 0
        %1722 = vmatpush1.bf16.msra.mxu0 0
        %1723 = vmatprep.subr.bf16.mxu0 0
        %1724 = vmatpush1.bf16.msra.mxu0 %v1707
        %1725 = vmatprep.subr.bf16.mxu0 0
        %1726 = vmatpush2.bf16.msra.mxu0 0
        %1727 = vmatprep.subr.bf16.mxu0 0
        %1728 = vmatpush2.bf16.msra.mxu0 0
        %1729 = vmatprep.subr.bf16.mxu0 0
        %1730 = vmatpush2.bf16.msra.mxu0 0
        %1731 = vmatprep.subr.bf16.mxu0 0
        %1732 = vmatpush2.bf16.msra.mxu0 0
        %1733 = vmatprep.subr.bf16.mxu0 0
        %1734 = vmatpush2.bf16.msra.mxu0 0
        %1735 = vmatprep.subr.bf16.mxu0 0
        %1736 = vmatpush2.bf16.msra.mxu0 0
        %1737 = vmatprep.subr.bf16.mxu0 0
        %1738 = vmatpush2.bf16.msra.mxu0 0
        %1739 = vmatprep.subr.bf16.mxu0 0
        %1740 = vmatpush2.bf16.msra.mxu0 0
        %1741 = vmatprep.mubr.bf16.mxu0 0
        %1742 = vmatmul.mubr.bf16.gmra.mxu0 %v1704
        %v1743 = vpop.f32.mrf.mxu0
        %v1744 = vadd.f32 0.0, %v1743
        %v1745 = vpop.f32.mrf.mxu0
        %v1746 = vpop.f32.mrf.mxu0
        %v1747 = vpop.f32.mrf.mxu0
        %1748 = vdwg.mxu0
        %1749 = vxpose.xlu0.b32.start [1/16] %v1606, 128
        %1750 = vxpose.xlu0.b32.cont [2/16] 0.0, 128
        %1751 = vxpose.xlu0.b32.cont [3/16] 0.0, 128
        %1752 = vxpose.xlu0.b32.cont [4/16] 0.0, 128
        %1753 = vxpose.xlu0.b32.cont [5/16] 0.0, 128
        %1754 = vxpose.xlu0.b32.cont [6/16] 0.0, 128
        %1755 = vxpose.xlu0.b32.cont [7/16] 0.0, 128
        %1756 = vxpose.xlu0.b32.cont [8/16] 0.0, 128
        %1757 = vxpose.xlu0.b32.cont [9/16] 0.0, 128
        %1758 = vxpose.xlu0.b32.cont [10/16] 0.0, 128
        %1759 = vxpose.xlu0.b32.cont [11/16] 0.0, 128
        %1760 = vxpose.xlu0.b32.cont [12/16] 0.0, 128
        %1761 = vxpose.xlu0.b32.cont [13/16] 0.0, 128
        %1762 = vxpose.xlu0.b32.cont [14/16] 0.0, 128
        %1763 = vxpose.xlu0.b32.cont [15/16] 0.0, 128
        %1764 = vxpose.xlu0.b32.end [16/16] 0.0, 128
        %v1765 = vpop.trf.xlu0
        %v1766 = vpop.trf.xlu0
        %v1767 = vpop.trf.xlu0
        %v1768 = vpop.trf.xlu0
        %v1769 = vpop.trf.xlu0
        %v1770 = vpop.trf.xlu0
        %v1771 = vpop.trf.xlu0
        %v1772 = vpop.trf.xlu0
        %v1773 = vpop.trf.xlu0
        %v1774 = vpop.trf.xlu0
        %v1775 = vpop.trf.xlu0
        %v1776 = vpop.trf.xlu0
        %v1777 = vpop.trf.xlu0
        %v1778 = vpop.trf.xlu0
        %v1779 = vpop.trf.xlu0
        %v1780 = vpop.trf.xlu0
        %1781 = vxpose.xlu0.b32.start [1/16] %v1652, 128
        %1782 = vxpose.xlu0.b32.cont [2/16] 0.0, 128
        %1783 = vxpose.xlu0.b32.cont [3/16] 0.0, 128
        %1784 = vxpose.xlu0.b32.cont [4/16] 0.0, 128
        %1785 = vxpose.xlu0.b32.cont [5/16] 0.0, 128
        %1786 = vxpose.xlu0.b32.cont [6/16] 0.0, 128
        %1787 = vxpose.xlu0.b32.cont [7/16] 0.0, 128
        %1788 = vxpose.xlu0.b32.cont [8/16] 0.0, 128
        %1789 = vxpose.xlu0.b32.cont [9/16] 0.0, 128
        %1790 = vxpose.xlu0.b32.cont [10/16] 0.0, 128
        %1791 = vxpose.xlu0.b32.cont [11/16] 0.0, 128
        %1792 = vxpose.xlu0.b32.cont [12/16] 0.0, 128
        %1793 = vxpose.xlu0.b32.cont [13/16] 0.0, 128
        %1794 = vxpose.xlu0.b32.cont [14/16] 0.0, 128
        %1795 = vxpose.xlu0.b32.cont [15/16] 0.0, 128
        %1796 = vxpose.xlu0.b32.end [16/16] 0.0, 128
        %v1797 = vpop.trf.xlu0
        %v1798 = vpop.trf.xlu0
        %v1799 = vpop.trf.xlu0
        %v1800 = vpop.trf.xlu0
        %v1801 = vpop.trf.xlu0
        %v1802 = vpop.trf.xlu0
        %v1803 = vpop.trf.xlu0
        %v1804 = vpop.trf.xlu0
        %v1805 = vpop.trf.xlu0
        %v1806 = vpop.trf.xlu0
        %v1807 = vpop.trf.xlu0
        %v1808 = vpop.trf.xlu0
        %v1809 = vpop.trf.xlu0
        %v1810 = vpop.trf.xlu0
        %v1811 = vpop.trf.xlu0
        %v1812 = vpop.trf.xlu0
        %1813 = vxpose.xlu0.b32.start [1/16] %v1698, 128
        %1814 = vxpose.xlu0.b32.cont [2/16] 0.0, 128
        %1815 = vxpose.xlu0.b32.cont [3/16] 0.0, 128
        %1816 = vxpose.xlu0.b32.cont [4/16] 0.0, 128
        %1817 = vxpose.xlu0.b32.cont [5/16] 0.0, 128
        %1818 = vxpose.xlu0.b32.cont [6/16] 0.0, 128
        %1819 = vxpose.xlu0.b32.cont [7/16] 0.0, 128
        %1820 = vxpose.xlu0.b32.cont [8/16] 0.0, 128
        %1821 = vxpose.xlu0.b32.cont [9/16] 0.0, 128
        %1822 = vxpose.xlu0.b32.cont [10/16] 0.0, 128
        %1823 = vxpose.xlu0.b32.cont [11/16] 0.0, 128
        %1824 = vxpose.xlu0.b32.cont [12/16] 0.0, 128
        %1825 = vxpose.xlu0.b32.cont [13/16] 0.0, 128
        %1826 = vxpose.xlu0.b32.cont [14/16] 0.0, 128
        %1827 = vxpose.xlu0.b32.cont [15/16] 0.0, 128
        %1828 = vxpose.xlu0.b32.end [16/16] 0.0, 128
        %v1829 = vpop.trf.xlu0
        %v1830 = vpop.trf.xlu0
        %v1831 = vpop.trf.xlu0
        %v1832 = vpop.trf.xlu0
        %v1833 = vpop.trf.xlu0
        %v1834 = vpop.trf.xlu0
        %v1835 = vpop.trf.xlu0
        %v1836 = vpop.trf.xlu0
        %v1837 = vpop.trf.xlu0
        %v1838 = vpop.trf.xlu0
        %v1839 = vpop.trf.xlu0
        %v1840 = vpop.trf.xlu0
        %v1841 = vpop.trf.xlu0
        %v1842 = vpop.trf.xlu0
        %v1843 = vpop.trf.xlu0
        %v1844 = vpop.trf.xlu0
        %1845 = vxpose.xlu0.b32.start [1/16] %v1744, 128
        %1846 = vxpose.xlu0.b32.cont [2/16] 0.0, 128
        %1847 = vxpose.xlu0.b32.cont [3/16] 0.0, 128
        %1848 = vxpose.xlu0.b32.cont [4/16] 0.0, 128
        %1849 = vxpose.xlu0.b32.cont [5/16] 0.0, 128
        %1850 = vxpose.xlu0.b32.cont [6/16] 0.0, 128
        %1851 = vxpose.xlu0.b32.cont [7/16] 0.0, 128
        %1852 = vxpose.xlu0.b32.cont [8/16] 0.0, 128
        %1853 = vxpose.xlu0.b32.cont [9/16] 0.0, 128
        %1854 = vxpose.xlu0.b32.cont [10/16] 0.0, 128
        %1855 = vxpose.xlu0.b32.cont [11/16] 0.0, 128
        %1856 = vxpose.xlu0.b32.cont [12/16] 0.0, 128
        %1857 = vxpose.xlu0.b32.cont [13/16] 0.0, 128
        %1858 = vxpose.xlu0.b32.cont [14/16] 0.0, 128
        %1859 = vxpose.xlu0.b32.cont [15/16] 0.0, 128
        %1860 = vxpose.xlu0.b32.end [16/16] 0.0, 128
        %v1861 = vpop.trf.xlu0
        %v1862 = vpop.trf.xlu0
        %v1863 = vpop.trf.xlu0
        %v1864 = vpop.trf.xlu0
        %v1865 = vpop.trf.xlu0
        %v1866 = vpop.trf.xlu0
        %v1867 = vpop.trf.xlu0
        %v1868 = vpop.trf.xlu0
        %v1869 = vpop.trf.xlu0
        %v1870 = vpop.trf.xlu0
        %v1871 = vpop.trf.xlu0
        %v1872 = vpop.trf.xlu0
        %v1873 = vpop.trf.xlu0
        %v1874 = vpop.trf.xlu0
        %v1875 = vpop.trf.xlu0
        %v1876 = vpop.trf.xlu0
        %1877 = vxpose.xlu0.b32.start [1/16] %v1765, 128
        %1878 = vxpose.xlu0.b32.cont [2/16] %v1797, 128
        %1879 = vxpose.xlu0.b32.cont [3/16] %v1829, 128
        %1880 = vxpose.xlu0.b32.cont [4/16] %v1861, 128
        %1881 = vxpose.xlu0.b32.cont [5/16] 0.0, 128
        %1882 = vxpose.xlu0.b32.cont [6/16] 0.0, 128
        %1883 = vxpose.xlu0.b32.cont [7/16] 0.0, 128
        %1884 = vxpose.xlu0.b32.cont [8/16] 0.0, 128
        %1885 = vxpose.xlu0.b32.cont [9/16] 0.0, 128
        %1886 = vxpose.xlu0.b32.cont [10/16] 0.0, 128
        %1887 = vxpose.xlu0.b32.cont [11/16] 0.0, 128
        %1888 = vxpose.xlu0.b32.cont [12/16] 0.0, 128
        %1889 = vxpose.xlu0.b32.cont [13/16] 0.0, 128
        %1890 = vxpose.xlu0.b32.cont [14/16] 0.0, 128
        %1891 = vxpose.xlu0.b32.cont [15/16] 0.0, 128
        %1892 = vxpose.xlu0.b32.end [16/16] 0.0, 128
        %v1893 = vpop.trf.xlu0
        %v1894 = vpop.trf.xlu0
        %v1895 = vpop.trf.xlu0
        %v1896 = vpop.trf.xlu0
        %v1897 = vpop.trf.xlu0
        %v1898 = vpop.trf.xlu0
        %v1899 = vpop.trf.xlu0
        %v1900 = vpop.trf.xlu0
        %v1901 = vpop.trf.xlu0
        %v1902 = vpop.trf.xlu0
        %v1903 = vpop.trf.xlu0
        %v1904 = vpop.trf.xlu0
        %v1905 = vpop.trf.xlu0
        %v1906 = vpop.trf.xlu0
        %v1907 = vpop.trf.xlu0
        %v1908 = vpop.trf.xlu0
        %v1909 = vpack.c.bf16 %v1893, %v1893
        %v1910 = vld [vmem:[%s668] sm:$0xf]
        %v1911 = vld [vmem:[%s668 + $0x4] sm:$0xf]
        %v1912 = vld [vmem:[%s668 + $0x8] sm:$0xf]
        %v1913 = vld [vmem:[%s668 + $0xc] sm:$0xf]
        %v1918 = vunpack.c.l.b16 %v1910
        %v1919 = vunpack.c.l.b16 %v1911
        %v1920 = vunpack.c.l.b16 %v1912
        %v1921 = vunpack.c.l.b16 %v1913
        %v1922 = vpack.c.b16 %v1919, %v1918
        %v1923 = vpack.c.b16 %v1921, %v1920
        %v1927 = vsel %vm706, %v1909, 0
        %1929 = vmatprep.subr.bf16.mxu0 0
        %1930 = vmatpush1.bf16.msra.mxu0 0
        %1931 = vmatprep.subr.bf16.mxu0 0
        %1932 = vmatpush1.bf16.msra.mxu0 0
        %1933 = vmatprep.subr.bf16.mxu0 0
        %1934 = vmatpush1.bf16.msra.mxu0 0
        %1935 = vmatprep.subr.bf16.mxu0 0
        %1936 = vmatpush1.bf16.msra.mxu0 0
        %1937 = vmatprep.subr.bf16.mxu0 0
        %1938 = vmatpush1.bf16.msra.mxu0 0
        %1939 = vmatprep.subr.bf16.mxu0 0
        %1940 = vmatpush1.bf16.msra.mxu0 0
        %1941 = vmatprep.subr.bf16.mxu0 0
        %1942 = vmatpush1.bf16.msra.mxu0 %v1923
        %1943 = vmatprep.subr.bf16.mxu0 0
        %1944 = vmatpush1.bf16.msra.mxu0 %v1922
        %1945 = vmatprep.subr.bf16.mxu0 0
        %1946 = vmatpush2.bf16.msra.mxu0 0
        %1947 = vmatprep.subr.bf16.mxu0 0
        %1948 = vmatpush2.bf16.msra.mxu0 0
        %1949 = vmatprep.subr.bf16.mxu0 0
        %1950 = vmatpush2.bf16.msra.mxu0 0
        %1951 = vmatprep.subr.bf16.mxu0 0
        %1952 = vmatpush2.bf16.msra.mxu0 0
        %1953 = vmatprep.subr.bf16.mxu0 0
        %1954 = vmatpush2.bf16.msra.mxu0 0
        %1955 = vmatprep.subr.bf16.mxu0 0
        %1956 = vmatpush2.bf16.msra.mxu0 0
        %1957 = vmatprep.subr.bf16.mxu0 0
        %1958 = vmatpush2.bf16.msra.mxu0 0
        %1959 = vmatprep.subr.bf16.mxu0 0
        %1960 = vmatpush2.bf16.msra.mxu0 0
        %1961 = vmatprep.mubr.bf16.mxu0 0
        %1962 = vmatmul.mubr.bf16.gmra.mxu0 %v1927
        %v1963 = vpop.f32.mrf.mxu0
        %v1964 = vadd.f32 0.0, %v1963
        %v1965 = vpop.f32.mrf.mxu0
        %v1966 = vpop.f32.mrf.mxu0
        %v1967 = vpop.f32.mrf.mxu0
        %1968 = vdwg.mxu0
        %1969 = vset.pattern.permute.xlu0 1
        %1970 = vperm.xlu0 %1969, %v914
        %v1971 = vpop.permute.xlu0 %1970
        %v1973 = vmul.f32 %v1964, %v1971
        %v1974 = vld [vmem:[%s671] sm:$0x1]
        %v1976 = vlaneseq
        %v1977 = vshrl.u32 %v1976, 7
        %v1978 = vsub.s32 0, %v1977
        %v1979 = vrot.slane %v1974, %v1978
        %v1981 = vadd.f32 %v1973, %v1979
        %v1982 = vadd.f32 %v702, %v1981
        %v1983 = vld [vmem:[%s674] sm:$0x1]
        %v1984 = vld [vmem:[%s677] sm:$0x1]
        %v1985 = vsel %vm706, %v1982, 0.0
        %1986 = vadd.xlane.f32.xlu0 %v1985
        %v1987 = vpop.xlane.xlu0 %1986
        %v1988 = vmul.f32 %v1987, %v710
        %v1989 = vsub.f32 %v1982, %v1988
        %v1990 = vmul.f32 %v1989, %v1989
        %v1991 = vsel %vm706, %v1990, 0.0
        %1992 = vadd.xlane.f32.xlu0 %v1991
        %v1993 = vpop.xlane.xlu0 %1992
        %v1994 = vmul.f32 %v1993, %v710
        %v1995 = vadd.f32 %v1994, 1e-05
        %v1996 = vrsqrt.pop %v1995
        %v1997 = vmul.f32 %v1989, %v1996
        %v1999 = vlaneseq
        %v2000 = vshrl.u32 %v1999, 7
        %v2001 = vsub.s32 0, %v2000
        %v2002 = vrot.slane %v1983, %v2001
        %v2004 = vmul.f32 %v1997, %v2002
        %v2006 = vlaneseq
        %v2007 = vshrl.u32 %v2006, 7
        %v2008 = vsub.s32 0, %v2007
        %v2009 = vrot.slane %v1984, %v2008
        %v2011 = vadd.f32 %v2004, %v2009
        %v2012 = vpack.c.bf16 %v2011, %v2011
        %v2013 = vld [vmem:[%s682] sm:$0xf]
        %v2014 = vld [vmem:[%s682 + $0x4] sm:$0xf]
        %v2015 = vld [vmem:[%s682 + $0x8] sm:$0xf]
        %v2016 = vld [vmem:[%s682 + $0xc] sm:$0xf]
        %v2021 = vunpack.c.l.b16 %v2013
        %v2022 = vunpack.c.l.b16 %v2014
        %v2023 = vunpack.c.l.b16 %v2015
        %v2024 = vunpack.c.l.b16 %v2016
        %v2025 = vpack.c.b16 %v2022, %v2021
        %v2026 = vpack.c.b16 %v2024, %v2023
        %v2030 = vsel %vm706, %v2012, 0
        %2032 = vmatprep.subr.bf16.mxu0 0
        %2033 = vmatpush1.bf16.msra.mxu0 0
        %2034 = vmatprep.subr.bf16.mxu0 0
        %2035 = vmatpush1.bf16.msra.mxu0 0
        %2036 = vmatprep.subr.bf16.mxu0 0
        %2037 = vmatpush1.bf16.msra.mxu0 0
        %2038 = vmatprep.subr.bf16.mxu0 0
        %2039 = vmatpush1.bf16.msra.mxu0 0
        %2040 = vmatprep.subr.bf16.mxu0 0
        %2041 = vmatpush1.bf16.msra.mxu0 0
        %2042 = vmatprep.subr.bf16.mxu0 0
        %2043 = vmatpush1.bf16.msra.mxu0 0
        %2044 = vmatprep.subr.bf16.mxu0 0
        %2045 = vmatpush1.bf16.msra.mxu0 %v2026
        %2046 = vmatprep.subr.bf16.mxu0 0
        %2047 = vmatpush1.bf16.msra.mxu0 %v2025
        %2048 = vmatprep.subr.bf16.mxu0 0
        %2049 = vmatpush2.bf16.msra.mxu0 0
        %2050 = vmatprep.subr.bf16.mxu0 0
        %2051 = vmatpush2.bf16.msra.mxu0 0
        %2052 = vmatprep.subr.bf16.mxu0 0
        %2053 = vmatpush2.bf16.msra.mxu0 0
        %2054 = vmatprep.subr.bf16.mxu0 0
        %2055 = vmatpush2.bf16.msra.mxu0 0
        %2056 = vmatprep.subr.bf16.mxu0 0
        %2057 = vmatpush2.bf16.msra.mxu0 0
        %2058 = vmatprep.subr.bf16.mxu0 0
        %2059 = vmatpush2.bf16.msra.mxu0 0
        %2060 = vmatprep.subr.bf16.mxu0 0
        %2061 = vmatpush2.bf16.msra.mxu0 0
        %2062 = vmatprep.subr.bf16.mxu0 0
        %2063 = vmatpush2.bf16.msra.mxu0 0
        %2064 = vmatprep.mubr.bf16.mxu0 0
        %2065 = vmatmul.mubr.bf16.gmra.mxu0 %v2030
        %v2066 = vpop.f32.mrf.mxu0
        %v2067 = vadd.f32 0.0, %v2066
        %v2068 = vpop.f32.mrf.mxu0
        %v2069 = vpop.f32.mrf.mxu0
        %v2070 = vpop.f32.mrf.mxu0
        %2071 = vdwg.mxu0
        %2072 = vset.pattern.permute.xlu0 2
        %2073 = vperm.xlu0 %2072, %v914
        %v2074 = vpop.permute.xlu0 %2073
        %v2076 = vmul.f32 %v2067, %v2074
        %v2077 = vld [vmem:[%s685] sm:$0x1]
        %v2079 = vlaneseq
        %v2080 = vshrl.u32 %v2079, 7
        %v2081 = vsub.s32 0, %v2080
        %v2082 = vrot.slane %v2077, %v2081
        %v2084 = vadd.f32 %v2076, %v2082
        %v2085 = vmul.f32 %v2084, %v2084
        %v2086 = vmul.f32 %v2084, %v2085
        %v2087 = vmul.f32 %v2086, 0.044715
        %v2088 = vadd.f32 %v2084, %v2087
        %v2089 = vmul.f32 %v2088, 0.7978846
        %v2090 = vtanh.pop %v2089
        %v2091 = vadd.f32 %v2090, 1.0
        %v2092 = vmul.f32 %v2091, 0.5
        %v2093 = vmul.f32 %v2084, %v2092
        %v2094 = vpack.c.bf16 %v2093, %v2093
        %v2095 = vld [vmem:[%s690] sm:$0xf]
        %v2096 = vld [vmem:[%s690 + $0x4] sm:$0xf]
        %v2097 = vld [vmem:[%s690 + $0x8] sm:$0xf]
        %v2098 = vld [vmem:[%s690 + $0xc] sm:$0xf]
        %v2099 = vld [vmem:[%s690 + $0x10] sm:$0xf]
        %v2100 = vld [vmem:[%s690 + $0x14] sm:$0xf]
        %v2101 = vld [vmem:[%s690 + $0x18] sm:$0xf]
        %v2102 = vld [vmem:[%s690 + $0x1c] sm:$0xf]
        %v2111 = vunpack.c.l.b16 %v2095
        %v2112 = vunpack.c.l.b16 %v2096
        %v2113 = vunpack.c.l.b16 %v2097
        %v2114 = vunpack.c.l.b16 %v2098
        %v2115 = vunpack.c.l.b16 %v2099
        %v2116 = vunpack.c.l.b16 %v2100
        %v2117 = vunpack.c.l.b16 %v2101
        %v2118 = vunpack.c.l.b16 %v2102
        %v2119 = vpack.c.b16 %v2112, %v2111
        %v2120 = vpack.c.b16 %v2114, %v2113
        %v2121 = vpack.c.b16 %v2116, %v2115
        %v2122 = vpack.c.b16 %v2118, %v2117
        %vm2127 = vcmask 523264
        %v2129 = vsel %vm2127, %v2094, 0
        %2131 = vmatprep.subr.bf16.mxu0 0
        %2132 = vmatpush1.bf16.msra.mxu0 0
        %2133 = vmatprep.subr.bf16.mxu0 0
        %2134 = vmatpush1.bf16.msra.mxu0 0
        %2135 = vmatprep.subr.bf16.mxu0 0
        %2136 = vmatpush1.bf16.msra.mxu0 0
        %2137 = vmatprep.subr.bf16.mxu0 0
        %2138 = vmatpush1.bf16.msra.mxu0 0
        %2139 = vmatprep.subr.bf16.mxu0 0
        %2140 = vmatpush1.bf16.msra.mxu0 %v2122
        %2141 = vmatprep.subr.bf16.mxu0 0
        %2142 = vmatpush1.bf16.msra.mxu0 %v2121
        %2143 = vmatprep.subr.bf16.mxu0 0
        %2144 = vmatpush1.bf16.msra.mxu0 %v2120
        %2145 = vmatprep.subr.bf16.mxu0 0
        %2146 = vmatpush1.bf16.msra.mxu0 %v2119
        %2147 = vmatprep.subr.bf16.mxu0 0
        %2148 = vmatpush2.bf16.msra.mxu0 0
        %2149 = vmatprep.subr.bf16.mxu0 0
        %2150 = vmatpush2.bf16.msra.mxu0 0
        %2151 = vmatprep.subr.bf16.mxu0 0
        %2152 = vmatpush2.bf16.msra.mxu0 0
        %2153 = vmatprep.subr.bf16.mxu0 0
        %2154 = vmatpush2.bf16.msra.mxu0 0
        %2155 = vmatprep.subr.bf16.mxu0 0
        %2156 = vmatpush2.bf16.msra.mxu0 0
        %2157 = vmatprep.subr.bf16.mxu0 0
        %2158 = vmatpush2.bf16.msra.mxu0 0
        %2159 = vmatprep.subr.bf16.mxu0 0
        %2160 = vmatpush2.bf16.msra.mxu0 0
        %2161 = vmatprep.subr.bf16.mxu0 0
        %2162 = vmatpush2.bf16.msra.mxu0 0
        %2163 = vmatprep.mubr.bf16.mxu0 0
        %2164 = vmatmul.mubr.bf16.gmra.mxu0 %v2129
        %v2165 = vpop.f32.mrf.mxu0
        %v2166 = vadd.f32 0.0, %v2165
        %v2167 = vpop.f32.mrf.mxu0
        %v2168 = vpop.f32.mrf.mxu0
        %v2169 = vpop.f32.mrf.mxu0
        %2170 = vdwg.mxu0
        %2171 = vset.pattern.permute.xlu0 3
        %2172 = vperm.xlu0 %2171, %v914
        %v2173 = vpop.permute.xlu0 %2172
        %v2175 = vmul.f32 %v2166, %v2173
        %v2176 = vld [vmem:[%s693] sm:$0x1]
        %v2178 = vlaneseq
        %v2179 = vshrl.u32 %v2178, 7
        %v2180 = vsub.s32 0, %v2179
        %v2181 = vrot.slane %v2176, %v2180
        %v2183 = vadd.f32 %v2175, %v2181
        %v2184 = vadd.f32 %v1982, %v2183
        %2185 = vst.msk [vmem:[#allocation2] sm:$0xff] %vm706, %v2184
        %p2186 = scmp.eq.s32.totalorder %s34, 1
        // Predicated region
        $region85: #{sparse_ternary_transformer.1} parent=79 // pred_check
          %p2187 = pneg %p2186
        $region86: #{sparse_ternary_transformer.1} parent=79 // pred_check_branch
          %2189 = sbr.rel (%p2187) target = $region88
        $region87: #{sparse_ternary_transformer.1} parent=79 // pred_region
          %v2190 = vld [vmem:[%s13] sm:$0x1]
          %v2191 = vld [vmem:[%s14] sm:$0x1]
          %v2192 = vsel %vm706, %v2184, 0.0
          %2193 = vadd.xlane.f32.xlu0 %v2192
          %v2194 = vpop.xlane.xlu0 %2193
          %v2195 = vmul.f32 %v2194, %v710
          %v2196 = vsub.f32 %v2184, %v2195
          %v2197 = vmul.f32 %v2196, %v2196
          %v2198 = vsel %vm706, %v2197, 0.0
          %2199 = vadd.xlane.f32.xlu0 %v2198
          %v2200 = vpop.xlane.xlu0 %2199
          %v2201 = vmul.f32 %v2200, %v710
          %v2202 = vadd.f32 %v2201, 1e-05
          %v2203 = vrsqrt.pop %v2202
          %v2204 = vmul.f32 %v2196, %v2203
          %v2206 = vlaneseq
          %v2207 = vshrl.u32 %v2206, 7
          %v2208 = vsub.s32 0, %v2207
          %v2209 = vrot.slane %v2190, %v2208
          %v2211 = vmul.f32 %v2204, %v2209
          %v2213 = vlaneseq
          %v2214 = vshrl.u32 %v2213, 7
          %v2215 = vsub.s32 0, %v2214
          %v2216 = vrot.slane %v2191, %v2215
          %v2218 = vadd.f32 %v2211, %v2216
          %2219 = vst.msk [vmem:[%s645] sm:$0xff] %vm706, %v2218
        $region88: #{sparse_ternary_transformer.1} parent=79 // pred_fallthru
          _
        %s2220 = sand.u32 %s429, 1
        %s2221 = scalar_lea.sflag [#allocation4], %s2220
        %s2222 = sand.u32 %s429, 1
        %s2223 = smul.addr %s2222, 8
        %s2224 = scalar_lea.vmem [#allocation3], %s2223
        // Predicated region
        $region89: #{sparse_ternary_transformer.1} parent=79 // pred_check
          %p2225 = pneg %p439
        $region90: #{sparse_ternary_transformer.1} parent=79 // pred_check_branch
          %2227 = sbr.rel (%p2225) target = $region92
        $region91: #{sparse_ternary_transformer.1} parent=79 // pred_region
          %s2229 = ssub.s32 128, 128
          %2230 = vsyncadd %s2221, %s2229
          %s2231 = smul.addr %s33, 128
          %s2232 = scalar_lea.hbm %s15, %s2231
          %s2234 = sshll.u32 %s2224, 4
          %s2235 = int_to_ptr.vmem [resolvable:$true] %s2234
          %2237 = dma.vmem_to_hbm [thread:$0]  %s2235, 128, %s2232, %s2221
        $region92: #{sparse_ternary_transformer.1} parent=79 // pred_fallthru
          _
      $region80: #{sparse_ternary_transformer.1} parent=5 // pred_fallthru
        _
      %p2238 = scmp.le.s32.totalorder 2, %s24
      // Predicated region
      $region93: #{sparse_ternary_transformer.1} parent=5 // pred_check
        %p2239 = pneg %p2238
      $region94: #{sparse_ternary_transformer.1} parent=5 // pred_check_branch
        %2241 = sbr.rel (%p2239) target = $region96
      $region95: #{sparse_ternary_transformer.1} parent=5 // pred_region
        %s2242 = ssub.s32 %s24, 2
        // Predicated region
        $region97: #{sparse_ternary_transformer.1} parent=95 // pred_check
          %p2243 = pneg %p445
        $region98: #{sparse_ternary_transformer.1} parent=95 // pred_check_branch
          %2245 = sbr.rel (%p2243) target = $region100
        $region99: #{sparse_ternary_transformer.1} parent=95 // pred_region
          %s2246 = sand.u32 %s430, 1
          %s2247 = scalar_lea.sflag [#allocation4], %s2246
          %s2248 = sand.u32 %s430, 1
          %s2249 = smul.addr %s2248, 8
          %s2250 = scalar_lea.vmem [#allocation3], %s2249
          %2251 = dma.done %s2247, 128
        $region100: #{sparse_ternary_transformer.1} parent=95 // pred_fallthru
          _
      $region96: #{sparse_ternary_transformer.1} parent=5 // pred_fallthru
        _
    $region6: #{sparse_ternary_transformer.1} parent=1 // loop_footer
      %s28 = sadd.s32 1, %s24
    $region7: #{sparse_ternary_transformer.1} parent=1 // loop_footer_branch
      %23 = sbr.rel target = $region3
    $region8: #{sparse_ternary_transformer.1} parent=1 // loop_exit
      _
    %2252 = vsyncpa [#allocation4], 1
    %s2253 = scalar_lea.sflag [#allocation4], 1
    %2254 = vsyncpa %s2253, 1

</llo_original>
